<compile_context>
chip_gen: v5e
topology: v5e:2x2
jax: 0.10.0
libtpu: 0.0.40
codegen_flags: <defaults>
</compile_context>

<pallas_src>
import functools
import math

import jax
import jax.numpy as jnp
from jax import lax
from jax.experimental import pallas as pl
from jax.experimental.pallas import tpu as pltpu


# --------------------------------------------------------------------------- helpers

def _round_up(x, m):
    return (x + m - 1) // m * m


def _gelu_exact(x):
    # nn.GELU() default = exact erf formulation.
    return 0.5 * x * (1.0 + lax.erf(x * (1.0 / math.sqrt(2.0))))


def _tpu_vmem_capacity():
    try:
        return int(pltpu.get_tpu_info().vmem_capacity_bytes)
    except Exception:
        return 64 << 20          # assume the smallest generation (v7x) when undetectable


_VMEM_CAP = _tpu_vmem_capacity()
_BIG_VMEM = _VMEM_CAP >= (96 << 20)          # v5e / v6e (128 MiB) vs v7x (64 MiB)


def _vmem_limit(est_bytes):
    """Generation-aware scoped-VMEM cap (~100 MiB on 128 MiB chips, ~50 MiB on v7x)."""
    ceiling = int(_VMEM_CAP * 0.78)
    want = int(est_bytes * 1.25) + (2 << 20)
    return int(min(ceiling, max(32 << 20, want)))


def _pick_row_tile(m, target):
    """Row tile: MXU-friendly, multiple of 8 (128 when large), >=2 grid steps when possible."""
    steps = max(2, pl.cdiv(m, target))
    tile = pl.cdiv(m, steps)
    tile = _round_up(tile, 128) if tile > 128 else _round_up(tile, 8)
    return min(tile, _round_up(m, 8))


def _pick_hidden_tile(h, target):
    """Hidden-dim tile: largest multiple-of-128 divisor of H up to `target`."""
    if h <= target:
        return h
    for cand in range(target, 127, -128):
        if h % cand == 0:
            return cand
    return h


def _pick_seq_tile(s, b):
    """Sequence tile for attention; keep >= 2 parallel (batch x q-tile) grid steps."""
    target = 512 if _BIG_VMEM else 256
    t = min(_round_up(s, 8), target)
    if b * pl.cdiv(s, t) < 2 and s >= 16:
        t = _round_up(pl.cdiv(s, 2), 8)
    return t


def _mlp_tiles(m, d, h, xbytes, wbytes):
    """Pick (row tile, hidden tile) for the MLP under a generation-aware VMEM budget."""
    budget = int(_VMEM_CAP * 0.45)
    row_target, hid_target = (1024, 2048) if _BIG_VMEM else (512, 1024)
    tm = _pick_row_tile(m, row_target)
    th = _pick_hidden_tile(h, hid_target)

    def est(tm_, th_):
        return (4 * tm_ * d * xbytes          # x + out tiles, double-buffered
                + 4 * d * th_ * wbytes        # W1 + W2 chunks, double-buffered
                + tm_ * d * (wbytes + 4)      # xn cache (bf16) + f32 accumulator
                + 4 * (th_ + 3 * d) * 4)      # biases / LN params (generous)

    while est(tm, th) > budget:
        new_tm, new_th = tm, th
        if tm > 128 and (4 * tm * d * xbytes >= 4 * d * th * wbytes or th <= 128):
            new_tm = max(128, _round_up(tm // 2, 8))
        elif th > 128:
            new_th = _pick_hidden_tile(h, max(128, th // 2))
        if (new_tm, new_th) == (tm, th):
            break
        tm, th = new_tm, new_th
    return tm, th


def _layer_norm_f32(x, w, b, eps):
    # One-pass E[x^2] - mean^2 variance, clamped at 0 to avoid rsqrt of a tiny negative.
    mean = jnp.mean(x, axis=-1, keepdims=True)
    var = jnp.maximum(jnp.mean(x * x, axis=-1, keepdims=True) - mean * mean, 0.0)
    return (x - mean) * lax.rsqrt(var + eps) * w + b


# --------------------------------------------------------------------------- kernel 1: LN1 + packed QKV

def _qkv_kernel(x_ref, ln_w_ref, ln_b_ref, wqkv_ref, q_ref, k_ref, v_ref, *, eps):
    x = x_ref[0].astype(jnp.float32)                       # (ts, D)
    d = x.shape[-1]
    xn = _layer_norm_f32(x, ln_w_ref[...], ln_b_ref[...], eps)
    qkv = jnp.dot(xn.astype(wqkv_ref.dtype), wqkv_ref[...],
                  preferred_element_type=jnp.float32)      # (ts, 3D)
    q_ref[0] = qkv[:, :d].astype(q_ref.dtype)
    k_ref[0] = qkv[:, d:2 * d].astype(k_ref.dtype)
    v_ref[0] = qkv[:, 2 * d:].astype(v_ref.dtype)


def _qkv_projection(x_pad, ln_w, ln_b, wqkv, *, ts, eps, compute_dtype):
    B, S_pad, D = x_pad.shape
    ns = S_pad // ts
    xbytes = jnp.dtype(x_pad.dtype).itemsize
    wbytes = jnp.dtype(wqkv.dtype).itemsize
    cbytes = jnp.dtype(compute_dtype).itemsize
    est = (2 * ts * D * xbytes + 6 * ts * D * cbytes      # x tile, q/k/v tiles (x2 buffers)
           + 2 * D * 3 * D * wbytes                       # packed QKV weight
           + 3 * ts * D * 4 + 4 * D * 4)                  # f32 intermediate + LN params

    qkv_sds = jax.ShapeDtypeStruct((B, S_pad, D), compute_dtype)
    return pl.pallas_call(
        functools.partial(_qkv_kernel, eps=eps),
        out_shape=(qkv_sds, qkv_sds, qkv_sds),
        grid_spec=pltpu.PrefetchScalarGridSpec(
            num_scalar_prefetch=0,
            grid=(B, ns),
            in_specs=[
                pl.BlockSpec((1, ts, D), lambda b, i: (b, i, 0)),    # x tile
                pl.BlockSpec((1, D), lambda b, i: (0, 0)),           # ln weight
                pl.BlockSpec((1, D), lambda b, i: (0, 0)),           # ln bias
                pl.BlockSpec((D, 3 * D), lambda b, i: (0, 0)),       # packed [Wq|Wk|Wv]
            ],
            out_specs=[
                pl.BlockSpec((1, ts, D), lambda b, i: (b, i, 0)),    # q
                pl.BlockSpec((1, ts, D), lambda b, i: (b, i, 0)),    # k
                pl.BlockSpec((1, ts, D), lambda b, i: (b, i, 0)),    # v
            ],
        ),
        compiler_params=pltpu.CompilerParams(
            dimension_semantics=("parallel", "parallel"),
            vmem_limit_bytes=_vmem_limit(est)),
    )(x_pad, ln_w, ln_b, wqkv)


# --------------------------------------------------------------------------- kernel 2: flash causal attention + proj + residual

def _flash_attn_kernel(x_ref, q_ref, k_ref, v_ref, wo_ref, bo_ref, o_ref,
                       m_ref, l_ref, acc_ref, *, num_heads, scale):
    qi = pl.program_id(1)
    ki = pl.program_id(2)
    tq = q_ref.shape[1]
    tk = k_ref.shape[1]
    hd = q_ref.shape[2] // num_heads

    @pl.when(ki == 0)
    def _():
        m_ref[...] = jnp.full(m_ref.shape, -jnp.inf, jnp.float32)
        l_ref[...] = jnp.zeros(l_ref.shape, jnp.float32)
        acc_ref[...] = jnp.zeros(acc_ref.shape, jnp.float32)

    # Skip compute on key tiles entirely above the causal diagonal (still prefetched).
    @pl.when(ki * tk <= qi * tq + (tq - 1))
    def _():
        q = q_ref[0]                                       # (tq, D) bf16
        k = k_ref[0]                                       # (tk, D) bf16
        v = v_ref[0]                                       # (tk, D) bf16
        row = qi * tq + lax.broadcasted_iota(jnp.int32, (tq, tk), 0)
        col = ki * tk + lax.broadcasted_iota(jnp.int32, (tq, tk), 1)
        causal = col <= row

        for h in range(num_heads):                         # static, small head loop
            lo, hi = h * hd, (h + 1) * hd
            # scores = q_h @ k_h^T (contract on head dim, no materialized transpose)
            s = lax.dot_general(q[:, lo:hi], k[:, lo:hi],
                                (((1,), (1,)), ((), ())),
                                preferred_element_type=jnp.float32) * scale
            s = jnp.where(causal, s, -1e30)

            m_prev = m_ref[:, h:h + 1]
            m_new = jnp.maximum(m_prev, jnp.max(s, axis=-1, keepdims=True))
            alpha = jnp.exp(m_prev - m_new)
            p = jnp.exp(s - m_new)                          # unnormalized probabilities
            l_ref[:, h:h + 1] = alpha * l_ref[:, h:h + 1] + jnp.sum(s * 0 + p,
                                                                    axis=-1, keepdims=True)
            acc_ref[:, lo:hi] = alpha * acc_ref[:, lo:hi] + jnp.dot(
                p.astype(v.dtype), v[:, lo:hi], preferred_element_type=jnp.float32)
            m_ref[:, h:h + 1] = m_new

    @pl.when(ki == pl.num_programs(2) - 1)
    def _():
        # Normalize once per row with an EUP approx reciprocal (no (S,S) divide),
        # then do the output projection as a single full-K (tq,D)@(D,D) matmul.
        inv_l = pl.reciprocal(l_ref[...], approx=True)                      # (tq, NH)
        inv_full = jnp.concatenate(
            [jnp.broadcast_to(inv_l[:, h:h + 1], (tq, hd)) for h in range(num_heads)],
            axis=-1)                                                         # (tq, D)
        o = (acc_ref[...] * inv_full).astype(wo_ref.dtype)
        proj = jnp.dot(o, wo_ref[...], preferred_element_type=jnp.float32) + bo_ref[...]
        o_ref[0] = (proj + x_ref[0].astype(jnp.float32)).astype(o_ref.dtype)


def msa_block(x, ln_w, ln_b, wqkv, wo, bo, *, num_heads, eps=1e-5, seq_tile=None,
              compute_dtype=jnp.bfloat16):
    """y = x + Proj(MultiHeadCausalAttention(LN1(x)))."""
    B, S, D = x.shape
    assert D % num_heads == 0, "embedding_dim must be divisible by num_heads"
    ts = _pick_seq_tile(S, B) if seq_tile is None else seq_tile
    assert ts % 8 == 0, "sequence tile must be a multiple of 8"

    s_pad = _round_up(S, ts)
    x_pad = jnp.pad(x, ((0, 0), (0, s_pad - S), (0, 0))) if s_pad != S else x

    q, k, v = _qkv_projection(x_pad, ln_w, ln_b, wqkv, ts=ts, eps=eps,
                              compute_dtype=compute_dtype)

    nqt = s_pad // ts
    hd = D // num_heads
    scale = 1.0 / math.sqrt(hd)
    xbytes = jnp.dtype(x.dtype).itemsize
    wbytes = jnp.dtype(wo.dtype).itemsize
    cbytes = jnp.dtype(compute_dtype).itemsize
    est = (2 * ts * D * (2 * xbytes + 3 * cbytes)     # x, out, q, k, v tiles (x2 buffers)
           + 2 * (D * D * wbytes + D * 4)             # Wo + bo
           + ts * D * 4 + 2 * ts * num_heads * 4      # acc + m/l scratch
           + 4 * ts * ts * 4)                         # per-head score temporaries

    kernel = functools.partial(_flash_attn_kernel, num_heads=num_heads, scale=scale)
    y_pad = pl.pallas_call(
        kernel,
        out_shape=jax.ShapeDtypeStruct((B, s_pad, D), x.dtype),
        grid_spec=pltpu.PrefetchScalarGridSpec(
            num_scalar_prefetch=0,
            grid=(B, nqt, nqt),
            in_specs=[
                pl.BlockSpec((1, ts, D), lambda b, i, j: (b, i, 0)),   # x (residual)
                pl.BlockSpec((1, ts, D), lambda b, i, j: (b, i, 0)),   # q  (query tile)
                pl.BlockSpec((1, ts, D), lambda b, i, j: (b, j, 0)),   # k  (key tile)
                pl.BlockSpec((1, ts, D), lambda b, i, j: (b, j, 0)),   # v  (key tile)
                pl.BlockSpec((D, D), lambda b, i, j: (0, 0)),          # Wo (proj)
                pl.BlockSpec((1, D), lambda b, i, j: (0, 0)),          # bo (proj bias)
            ],
            out_specs=pl.BlockSpec((1, ts, D), lambda b, i, j: (b, i, 0)),
            scratch_shapes=[
                pltpu.VMEM((ts, num_heads), jnp.float32),   # running max per head
                pltpu.VMEM((ts, num_heads), jnp.float32),   # running sum per head
                pltpu.VMEM((ts, D), jnp.float32),           # unnormalized head outputs
            ],
        ),
        compiler_params=pltpu.CompilerParams(
            dimension_semantics=("parallel", "parallel", "arbitrary"),
            vmem_limit_bytes=_vmem_limit(est)),
    )(x_pad, q, k, v, wo, bo)

    return y_pad[:, :S, :] if s_pad != S else y_pad


# --------------------------------------------------------------------------- kernel 3: LN2 + MLP + residual

def _mlp_kernel(x_ref, ln_w_ref, ln_b_ref, w1_ref, b1_ref, w2_ref, b2_ref,
                o_ref, xn_ref, acc_ref, *, eps):
    """Row tile i (parallel) x hidden chunk k (arbitrary reduction):
       out = x + (GELU(LN(x) @ W1 + b1) @ W2 + b2), accumulated over hidden chunks."""
    k = pl.program_id(1)

    @pl.when(k == 0)
    def _():
        x = x_ref[...].astype(jnp.float32)
        xn = _layer_norm_f32(x, ln_w_ref[...], ln_b_ref[...], eps)
        xn_ref[...] = xn.astype(xn_ref.dtype)         # cache LN output (bf16) across k
        acc_ref[...] = jnp.zeros(acc_ref.shape, jnp.float32)

    h = jnp.dot(xn_ref[...], w1_ref[...], preferred_element_type=jnp.float32) + b1_ref[...]
    g = _gelu_exact(h)
    acc_ref[...] += jnp.dot(g.astype(w2_ref.dtype), w2_ref[...],
                            preferred_element_type=jnp.float32)

    @pl.when(k == pl.num_programs(1) - 1)
    def _():
        out = acc_ref[...] + b2_ref[...] + x_ref[...].astype(jnp.float32)  # bias + residual
        o_ref[...] = out.astype(o_ref.dtype)


def mlp_block(x, ln_w, ln_b, w1, b1, w2, b2, *, eps=1e-5, tm=None, th=None):
    B, S, D = x.shape
    H = w1.shape[1]
    M = B * S

    xbytes = jnp.dtype(x.dtype).itemsize
    wbytes = jnp.dtype(w1.dtype).itemsize
    auto_tm, auto_th = _mlp_tiles(M, D, H, xbytes, wbytes)
    tm = auto_tm if tm is None else tm
    th = auto_th if th is None else th
    assert tm % 8 == 0, "row tile must be a multiple of 8 sublanes"
    assert H % th == 0, "hidden tile must divide mlp_size"

    # cdiv grid + zero padding (padded rows have var=0, clamped; discarded below).
    x2d = x.reshape(M, D)
    m_pad = _round_up(M, tm)
    if m_pad != M:
        x2d = jnp.pad(x2d, ((0, m_pad - M), (0, 0)))
    grid = (m_pad // tm, H // th)

    est = (4 * tm * D * xbytes + 4 * D * th * wbytes
           + tm * D * (wbytes + 4) + 4 * (th + 3 * D) * 4)

    out2d = pl.pallas_call(
        functools.partial(_mlp_kernel, eps=eps),
        out_shape=jax.ShapeDtypeStruct((m_pad, D), x.dtype),
        grid_spec=pltpu.PrefetchScalarGridSpec(
            num_scalar_prefetch=0,
            grid=grid,
            in_specs=[
                pl.BlockSpec((tm, D), lambda i, k: (i, 0)),    # x rows tile
                pl.BlockSpec((1, D), lambda i, k: (0, 0)),     # ln weight
                pl.BlockSpec((1, D), lambda i, k: (0, 0)),     # ln bias
                pl.BlockSpec((D, th), lambda i, k: (0, k)),    # W1 hidden chunk
                pl.BlockSpec((1, th), lambda i, k: (0, k)),    # b1 hidden chunk
                pl.BlockSpec((th, D), lambda i, k: (k, 0)),    # W2 hidden chunk
                pl.BlockSpec((1, D), lambda i, k: (0, 0)),     # b2
            ],
            out_specs=pl.BlockSpec((tm, D), lambda i, k: (i, 0)),
            scratch_shapes=[
                pltpu.VMEM((tm, D), w1.dtype),           # cached LN output (bf16)
                pltpu.VMEM((tm, D), jnp.float32),        # output accumulator
            ],
        ),
        compiler_params=pltpu.CompilerParams(
            dimension_semantics=("parallel", "arbitrary"),
            vmem_limit_bytes=_vmem_limit(est)),
    )(x2d, ln_w, ln_b, w1, b1, w2, b2)

    out2d = out2d[:M] if m_pad != M else out2d
    return out2d.reshape(B, S, D)


# --------------------------------------------------------------------------- full block

def prepare_params(raw, matmul_dtype=jnp.bfloat16):
    """One-time parameter prep: pack QKV weights and pre-cast matmul weights to bf16
    (no per-forward astype HBM traffic). Weight layout is (in, out)."""
    D = raw["wq"].shape[0]
    H = raw["w1"].shape[1]
    return dict(
        ln1_w=raw["ln1_w"].reshape(1, D).astype(jnp.float32),
        ln1_b=raw["ln1_b"].reshape(1, D).astype(jnp.float32),
        wqkv=jnp.concatenate([raw["wq"], raw["wk"], raw["wv"]], axis=1).astype(matmul_dtype),
        wo=raw["wo"].astype(matmul_dtype),
        bo=raw["bo"].reshape(1, D).astype(jnp.float32),
        ln2_w=raw["ln2_w"].reshape(1, D).astype(jnp.float32),
        ln2_b=raw["ln2_b"].reshape(1, D).astype(jnp.float32),
        w1=raw["w1"].astype(matmul_dtype),
        b1=raw["b1"].reshape(1, H).astype(jnp.float32),
        w2=raw["w2"].astype(matmul_dtype),
        b2=raw["b2"].reshape(1, D).astype(jnp.float32),
    )


def transformer_encoder_block(x, p, *, num_heads, eps=1e-5, seq_tile=None,
                              mlp_tm=None, mlp_th=None):
    """x: (B, S, D); p: output of prepare_params."""
    y = msa_block(x, p["ln1_w"], p["ln1_b"], p["wqkv"], p["wo"], p["bo"],
                  num_heads=num_heads, eps=eps, seq_tile=seq_tile)
    z = mlp_block(y, p["ln2_w"], p["ln2_b"], p["w1"], p["b1"], p["w2"], p["b2"],
                  eps=eps, tm=mlp_tm, th=mlp_th)
    return z


# --------------------------------------------------------------------------- pure-JAX reference

def reference_encoder_block(x, p, *, num_heads, eps=1e-5, matmul_dtype=None):
    if matmul_dtype is None:
        prec = lax.Precision.HIGHEST
        def mm(a, b):
            return jnp.dot(a, b, precision=prec, preferred_element_type=jnp.float32)
        def bmm(eq, a, b):
            return jnp.einsum(eq, a, b, precision=prec, preferred_element_type=jnp.float32)
    else:
        def mm(a, b):
            return jnp.dot(a.astype(matmul_dtype), b.astype(matmul_dtype),
                           preferred_element_type=jnp.float32)
        def bmm(eq, a, b):
            return jnp.einsum(eq, a.astype(matmul_dtype), b.astype(matmul_dtype),
                              preferred_element_type=jnp.float32)

    def ln(v, w, b):
        m = jnp.mean(v, -1, keepdims=True)
        var = jnp.mean((v - m) ** 2, -1, keepdims=True)
        return (v - m) / jnp.sqrt(var + eps) * w + b

    B, S, D = x.shape
    hd = D // num_heads
    xf = x.astype(jnp.float32)

    xn = ln(xf, p["ln1_w"], p["ln1_b"])
    q, k, v = mm(xn, p["wq"]), mm(xn, p["wk"]), mm(xn, p["wv"])
    causal = jnp.tril(jnp.ones((S, S), dtype=bool))
    heads = []
    for h in range(num_heads):
        sl = slice(h * hd, (h + 1) * hd)
        s = bmm("bqd,bkd->bqk", q[..., sl], k[..., sl]) * (hd ** -0.5)
        s = jnp.where(causal, s, -jnp.inf)
        w_ = jax.nn.softmax(s, axis=-1)
        heads.append(bmm("bqk,bkd->bqd", w_, v[..., sl]))
    attn = mm(jnp.concatenate(heads, axis=-1), p["wo"]) + p["bo"]
    y = attn + xf

    yn = ln(y, p["ln2_w"], p["ln2_b"])
    h1 = mm(yn, p["w1"]) + p["b1"]
    g = 0.5 * h1 * (1.0 + lax.erf(h1 / math.sqrt(2.0)))
    out = mm(g, p["w2"]) + p["b2"] + y
    return out.astype(x.dtype)


# --------------------------------------------------------------------------- demo / self-test

if __name__ == "__main__":
    D, H, NH = 256, 512, 2          # head_dim = 128 (lane aligned)

    key = jax.random.PRNGKey(0)
    ks = jax.random.split(key, 16)

    def uinit(k, shape, fan_in):
        lim = 1.0 / math.sqrt(fan_in)
        return jax.random.uniform(k, shape, jnp.float32, -lim, lim)

    raw = dict(
        ln1_w=1.0 + 0.1 * jax.random.normal(ks[1], (D,), jnp.float32),
        ln1_b=0.1 * jax.random.normal(ks[2], (D,), jnp.float32),
        wq=uinit(ks[3], (D, D), D),
        wk=uinit(ks[4], (D, D), D),
        wv=uinit(ks[5], (D, D), D),
        wo=uinit(ks[6], (D, D), D),
        bo=uinit(ks[7], (D,), D),
        ln2_w=1.0 + 0.1 * jax.random.normal(ks[8], (D,), jnp.float32),
        ln2_b=0.1 * jax.random.normal(ks[9], (D,), jnp.float32),
        w1=uinit(ks[10], (D, H), D),
        b1=uinit(ks[11], (H,), D),
        w2=uinit(ks[12], (H, D), H),
        b2=uinit(ks[13], (D,), H),
    )
    params = prepare_params(raw)     # one-time bf16 cast + QKV packing

    def run_and_check(x, **kw):
        out = jax.block_until_ready(
            transformer_encoder_block(x, params, num_heads=NH, **kw))
        assert out.shape == x.shape
        ref_bf16 = reference_encoder_block(x, raw, num_heads=NH, matmul_dtype=jnp.bfloat16)
        ref_f32 = reference_encoder_block(x, raw, num_heads=NH, matmul_dtype=None)
        assert jnp.allclose(out, ref_bf16, atol=2e-2, rtol=2e-2), "mismatch vs bf16 reference"
        assert jnp.allclose(out, ref_f32, atol=6e-2, rtol=6e-2), "mismatch vs f32 reference"
        return out

    # Base small shape (B, S, D) = (2, 8, 256).
    x = jax.random.normal(ks[0], (2, 8, D), dtype=jnp.float32)
    run_and_check(x)

    # Multi-tile flash path: several q/k tiles -> online softmax + causal tile skipping,
    # plus the MLP hidden-chunk reduction and multi-row-tile paths.
    x2 = jax.random.normal(ks[14], (2, 24, D), dtype=jnp.float32)
    run_and_check(x2, seq_tile=8, mlp_tm=8, mlp_th=128)

    # Padded-sequence path (S not a multiple of the sequence tile).
    x3 = jax.random.normal(ks[15], (2, 20, D), dtype=jnp.float32)
    run_and_check(x3, seq_tile=8)

    print("KERNEL_OK")
</pallas_src>

<mosaic_0001>
module attributes {stable_mosaic.version = 11 : i64} {
  func.func @_qkv_kernel(%arg0: i32, %arg1: i32, %arg2: memref<1x8x256xf32, #tpu.memory_space<vmem>>, %arg3: memref<1x256xf32, #tpu.memory_space<vmem>>, %arg4: memref<1x256xf32, #tpu.memory_space<vmem>>, %arg5: memref<256x768xbf16, #tpu.memory_space<vmem>>, %arg6: memref<1x8x256xbf16, #tpu.memory_space<vmem>>, %arg7: memref<1x8x256xbf16, #tpu.memory_space<vmem>>, %arg8: memref<1x8x256xbf16, #tpu.memory_space<vmem>>) attributes {dimension_semantics = [#tpu.dimension_semantics<parallel>, #tpu.dimension_semantics<parallel>], iteration_bounds = array<i64: 2, 1>, scalar_prefetch = 0 : i64, scratch_operands = 0 : i64, tpu.core_type = #tpu.core_type<tc>, window_params = [{transform_indices = @transform_0, window_bounds = array<i64: 1, 8, 256>}, {pipeline_mode = #tpu.pipeline_mode<synchronous>, transform_indices = @transform_1, window_bounds = array<i64: 1, 256>}, {pipeline_mode = #tpu.pipeline_mode<synchronous>, transform_indices = @transform_2, window_bounds = array<i64: 1, 256>}, {pipeline_mode = #tpu.pipeline_mode<synchronous>, transform_indices = @transform_3, window_bounds = array<i64: 256, 768>}, {transform_indices = @transform_4, window_bounds = array<i64: 1, 8, 256>}, {transform_indices = @transform_5, window_bounds = array<i64: 1, 8, 256>}, {transform_indices = @transform_6, window_bounds = array<i64: 1, 8, 256>}]} {
    %c0 = arith.constant 0 : index
    %c0_0 = arith.constant 0 : index
    %c0_1 = arith.constant 0 : index
    %0 = vector.load %arg2[%c0, %c0_0, %c0_1] : memref<1x8x256xf32, #tpu.memory_space<vmem>>, vector<1x8x256xf32>
    %1 = vector.shape_cast %0 : vector<1x8x256xf32> to vector<8x256xf32>
    %c0_2 = arith.constant 0 : index
    %c0_3 = arith.constant 0 : index
    %2 = vector.load %arg3[%c0_2, %c0_3] : memref<1x256xf32, #tpu.memory_space<vmem>>, vector<1x256xf32>
    %c0_4 = arith.constant 0 : index
    %c0_5 = arith.constant 0 : index
    %3 = vector.load %arg4[%c0_4, %c0_5] : memref<1x256xf32, #tpu.memory_space<vmem>>, vector<1x256xf32>
    %cst = arith.constant dense<0.000000e+00> : vector<8xf32>
    %4 = vector.multi_reduction <add>, %1, %cst [1] : vector<8x256xf32> to vector<8xf32>
    %5 = vector.shape_cast %4 : vector<8xf32> to vector<8x1xf32>
    %cst_6 = arith.constant 2.560000e+02 : f32
    %6 = vector.broadcast %cst_6 : f32 to vector<8x1xf32>
    %7 = arith.divf %5, %6 : vector<8x1xf32>
    %8 = arith.mulf %1, %1 : vector<8x256xf32>
    %cst_7 = arith.constant dense<0.000000e+00> : vector<8xf32>
    %9 = vector.multi_reduction <add>, %8, %cst_7 [1] : vector<8x256xf32> to vector<8xf32>
    %10 = vector.shape_cast %9 : vector<8xf32> to vector<8x1xf32>
    %cst_8 = arith.constant 2.560000e+02 : f32
    %11 = vector.broadcast %cst_8 : f32 to vector<8x1xf32>
    %12 = arith.divf %10, %11 : vector<8x1xf32>
    %13 = arith.mulf %7, %7 : vector<8x1xf32>
    %14 = arith.subf %12, %13 : vector<8x1xf32>
    %cst_9 = arith.constant 0.000000e+00 : f32
    %15 = vector.broadcast %cst_9 : f32 to vector<8x1xf32>
    %16 = arith.maximumf %14, %15 : vector<8x1xf32>
    %17 = vector.broadcast %7 : vector<8x1xf32> to vector<8x256xf32>
    %18 = arith.subf %1, %17 : vector<8x256xf32>
    %cst_10 = arith.constant 9.99999974E-6 : f32
    %19 = vector.broadcast %cst_10 : f32 to vector<8x1xf32>
    %20 = arith.addf %16, %19 : vector<8x1xf32>
    %21 = math.rsqrt %20 : vector<8x1xf32>
    %22 = vector.broadcast %21 : vector<8x1xf32> to vector<8x256xf32>
    %23 = arith.mulf %18, %22 : vector<8x256xf32>
    %24 = vector.broadcast %2 : vector<1x256xf32> to vector<8x256xf32>
    %25 = arith.mulf %23, %24 : vector<8x256xf32>
    %26 = vector.broadcast %3 : vector<1x256xf32> to vector<8x256xf32>
    %27 = arith.addf %25, %26 : vector<8x256xf32>
    %28 = arith.truncf %27 : vector<8x256xf32> to vector<8x256xbf16>
    %c0_11 = arith.constant 0 : index
    %c0_12 = arith.constant 0 : index
    %29 = vector.load %arg5[%c0_11, %c0_12] : memref<256x768xbf16, #tpu.memory_space<vmem>>, vector<256x768xbf16>
    %cst_13 = arith.constant dense<0.000000e+00> : vector<8x768xf32>
    %30 = tpu.matmul %28, %29, %cst_13 {dimension_numbers = #tpu.dot_dimension_numbers<[1], [0], [0], [1], [0, 0, 1, 1], [], []>} : vector<8x256xbf16>, vector<256x768xbf16>, vector<8x768xf32> -> vector<8x768xf32>
    %31 = vector.extract_strided_slice %30 {offsets = [0, 0], sizes = [8, 256], strides = [1, 1]} : vector<8x768xf32> to vector<8x256xf32>
    %32 = arith.truncf %31 : vector<8x256xf32> to vector<8x256xbf16>
    %c0_14 = arith.constant 0 : index
    %c0_15 = arith.constant 0 : index
    %c0_16 = arith.constant 0 : index
    %33 = vector.load %arg6[%c0_14, %c0_15, %c0_16] : memref<1x8x256xbf16, #tpu.memory_space<vmem>>, vector<1x8x256xbf16>
    %34 = vector.shape_cast %33 : vector<1x8x256xbf16> to vector<8x256xbf16>
    %35 = vector.shape_cast %32 : vector<8x256xbf16> to vector<1x8x256xbf16>
    tpu.vector_store %arg6[%c0_14, %c0_15, %c0_16], %35 {strides = array<i32>} : memref<1x8x256xbf16, #tpu.memory_space<vmem>>, vector<1x8x256xbf16>,
    %36 = vector.extract_strided_slice %30 {offsets = [0, 256], sizes = [8, 256], strides = [1, 1]} : vector<8x768xf32> to vector<8x256xf32>
    %37 = arith.truncf %36 : vector<8x256xf32> to vector<8x256xbf16>
    %c0_17 = arith.constant 0 : index
    %c0_18 = arith.constant 0 : index
    %c0_19 = arith.constant 0 : index
    %38 = vector.load %arg7[%c0_17, %c0_18, %c0_19] : memref<1x8x256xbf16, #tpu.memory_space<vmem>>, vector<1x8x256xbf16>
    %39 = vector.shape_cast %38 : vector<1x8x256xbf16> to vector<8x256xbf16>
    %40 = vector.shape_cast %37 : vector<8x256xbf16> to vector<1x8x256xbf16>
    tpu.vector_store %arg7[%c0_17, %c0_18, %c0_19], %40 {strides = array<i32>} : memref<1x8x256xbf16, #tpu.memory_space<vmem>>, vector<1x8x256xbf16>,
    %41 = vector.extract_strided_slice %30 {offsets = [0, 512], sizes = [8, 256], strides = [1, 1]} : vector<8x768xf32> to vector<8x256xf32>
    %42 = arith.truncf %41 : vector<8x256xf32> to vector<8x256xbf16>
    %c0_20 = arith.constant 0 : index
    %c0_21 = arith.constant 0 : index
    %c0_22 = arith.constant 0 : index
    %43 = vector.load %arg8[%c0_20, %c0_21, %c0_22] : memref<1x8x256xbf16, #tpu.memory_space<vmem>>, vector<1x8x256xbf16>
    %44 = vector.shape_cast %43 : vector<1x8x256xbf16> to vector<8x256xbf16>
    %45 = vector.shape_cast %42 : vector<8x256xbf16> to vector<1x8x256xbf16>
    tpu.vector_store %arg8[%c0_20, %c0_21, %c0_22], %45 {strides = array<i32>} : memref<1x8x256xbf16, #tpu.memory_space<vmem>>, vector<1x8x256xbf16>,
    return
  }
  func.func @transform_0(%arg0: i32, %arg1: i32) -> (i32, i32, i32) {
    %c0_i32 = arith.constant 0 : i32
    %c0_i32_0 = arith.constant 0 : i32
    return %arg0, %arg1, %c0_i32 : i32, i32, i32
  }
  func.func @transform_1(%arg0: i32, %arg1: i32) -> (i32, i32) {
    %c0_i32 = arith.constant 0 : i32
    %c0_i32_0 = arith.constant 0 : i32
    %c0_i32_1 = arith.constant 0 : i32
    return %c0_i32, %c0_i32_0 : i32, i32
  }
  func.func @transform_2(%arg0: i32, %arg1: i32) -> (i32, i32) {
    %c0_i32 = arith.constant 0 : i32
    %c0_i32_0 = arith.constant 0 : i32
    %c0_i32_1 = arith.constant 0 : i32
    return %c0_i32, %c0_i32_0 : i32, i32
  }
  func.func @transform_3(%arg0: i32, %arg1: i32) -> (i32, i32) {
    %c0_i32 = arith.constant 0 : i32
    %c0_i32_0 = arith.constant 0 : i32
    %c0_i32_1 = arith.constant 0 : i32
    return %c0_i32, %c0_i32_0 : i32, i32
  }
  func.func @transform_4(%arg0: i32, %arg1: i32) -> (i32, i32, i32) {
    %c0_i32 = arith.constant 0 : i32
    %c0_i32_0 = arith.constant 0 : i32
    return %arg0, %arg1, %c0_i32 : i32, i32, i32
  }
  func.func @transform_5(%arg0: i32, %arg1: i32) -> (i32, i32, i32) {
    %c0_i32 = arith.constant 0 : i32
    %c0_i32_0 = arith.constant 0 : i32
    return %arg0, %arg1, %c0_i32 : i32, i32, i32
  }
  func.func @transform_6(%arg0: i32, %arg1: i32) -> (i32, i32, i32) {
    %c0_i32 = arith.constant 0 : i32
    %c0_i32_0 = arith.constant 0 : i32
    return %arg0, %arg1, %c0_i32 : i32, i32, i32
  }
}

</mosaic_0001>

<llo_original>
// kernel: tpu_custom_call.1
$region0: #{tpu_custom_call.1}
  #allocation0 [shape = 'u32[]', space=smem, size = 0x4, offset = 0x4, fixed_abs, tag = 'smem constant byte address 0x4 - core index']
  #allocation1 [shape = 'u32[72,128]{1,0:T(1,128)}', space=vmem, size = 0x9000, scoped, tag = 'internal scratch']
  %s0 = inlined_call_operand.hbm [shape: f32[2,8,256], index: 0, kind: input, shape index: {}]
  %s1 = inlined_call_operand.hbm [shape: f32[1,256], index: 1, kind: input, shape index: {}]
  %s2 = inlined_call_operand.hbm [shape: f32[1,256], index: 2, kind: input, shape index: {}]
  %s3 = inlined_call_operand.hbm [shape: bf16[256,768], index: 3, kind: input, shape index: {}]
  %s4 = inlined_call_operand.hbm [shape: bf16[2,8,256], index: 4, kind: output, shape index: {0}]
  %s5 = inlined_call_operand.hbm [shape: bf16[2,8,256], index: 5, kind: output, shape index: {1}]
  %s6 = inlined_call_operand.hbm [shape: bf16[2,8,256], index: 6, kind: output, shape index: {2}]
  %7 = xla_tuple %s4, %s5, %s6
  %s8 = sld [smem:[#allocation0]]
  $region81: #{tpu_custom_call.1} parent=0
    _
  %s10 = ssub.s32 1, %s8
  %s11 = scalar_select 0, %s10, %s8
  $region1: #{tpu_custom_call.1} parent=0
    #allocation2 [shape = 'u8[16384]{0}', space=vmem, size = 0x4000, scoped, tag = 'input window, operand 0']
    #allocation3 [shape = 's32[2]{0}', space=sflag, size = 0x8, scoped, tag = 'scoped memory for tpu_custom_call.1']
    #allocation4 [shape = 's32[2]{0}', space=sflag, size = 0x8, scoped, tag = 'scoped memory for tpu_custom_call.1']
    #allocation5 [shape = 'u8[1024]{0}', space=vmem, size = 0x400, scoped, tag = 'input window, operand 1, single buffered']
    #allocation6 [shape = 's32[1]{0}', space=sflag, size = 0x4, scoped, tag = 'scoped memory for tpu_custom_call.1']
    #allocation7 [shape = 'u8[1024]{0}', space=vmem, size = 0x400, scoped, tag = 'input window, operand 2, single buffered']
    #allocation8 [shape = 'u8[393216]{0}', space=vmem, size = 0x60000, scoped, tag = 'input window, operand 3, single buffered']
    #allocation9 [shape = 's32[1]{0}', space=sflag, size = 0x4, scoped, tag = 'scoped memory for tpu_custom_call.1']
    #allocation10 [shape = 'u8[8192]{0}', space=vmem, size = 0x2000, scoped, tag = 'output window, operand 0']
    #allocation11 [shape = 'u8[8192]{0}', space=vmem, size = 0x2000, scoped, tag = 'output window, operand 1']
    #allocation12 [shape = 's32[2]{0}', space=sflag, size = 0x8, scoped, tag = 'scoped memory for tpu_custom_call.1']
    #allocation13 [shape = 'u8[8192]{0}', space=vmem, size = 0x2000, scoped, tag = 'output window, operand 2']
    %12 = vsyncpa [#allocation3], 0
    %s13 = scalar_lea.sflag [#allocation3], 1
    %14 = vsyncpa %s13, 0
    %15 = vsyncpa [#allocation6], 0
    %16 = vsyncpa [#allocation9], 0
    %17 = vsyncpa [#allocation4], 0
    %s18 = scalar_lea.sflag [#allocation4], 1
    %19 = vsyncpa %s18, 0
    %20 = vsyncpa [#allocation12], 0
    %s21 = scalar_lea.sflag [#allocation12], 1
    %22 = vsyncpa %s21, 0
    loop: start=0, step=1, limit=4
    $region2: #{tpu_custom_call.1} parent=1 // loop_pre_header
      _
    $region3: #{tpu_custom_call.1} parent=1 // loop_header
      %s24 = sphi 0, %s28
      %p25 = scmp.ge.s32.totalorder %s24, 4
      %s31 = sphi 0, %s43
      %s32 = sphi 0, %s39
      %s33 = sphi 0, %s31
      %s34 = sphi 0, %s32
      %s35 = sphi 0, %s33
      %s36 = sphi 0, %s34
      %s48 = sphi 0, %s50
      %s51 = sphi 0, %s48
      %s52 = sphi 0, %s51
      %s68 = sphi 0, %s52
      %s72 = sphi 0, %s72
      %s74 = sphi 0, %s72
      %s75 = sphi 0, %s74
      %s89 = sphi 0, %s75
      %s93 = sphi 0, %s93
      %s95 = sphi 0, %s93
      %s96 = sphi 0, %s95
      %s110 = sphi 0, %s96
      %s114 = sphi 0, %s114
      %s116 = sphi 0, %s114
      %s117 = sphi 0, %s116
      %s131 = sphi 0, %s117
      %s139 = sphi 0, %s141
      %s142 = sphi 0, %s139
      %s143 = sphi 0, %s142
      %s159 = sphi 0, %s143
      %s167 = sphi 0, %s169
      %s170 = sphi 0, %s167
      %s171 = sphi 0, %s170
      %s187 = sphi 0, %s171
      %s195 = sphi 0, %s197
      %s198 = sphi 0, %s195
      %s199 = sphi 0, %s198
      %s215 = sphi 0, %s199
    $region4: #{tpu_custom_call.1} parent=1 // loop_header_branch
      %27 = sbr.rel (%p25) target = $region8
    $region5: #{tpu_custom_call.1} parent=1 // loop_body
      %s29 = ssub.s32 %s24, 1
      %s30 = ssub.s32 %s24, 2
      %s37 = sadd.s32 1, %s32
      %p38 = scmp.ge.s32.totalorder %s37, 1
      %s39 = scalar_select %p38, 0, %s37
      %s40 = sadd.s32 1, %s31
      %s41 = scalar_select %p38, %s40, %s31
      %p42 = scmp.ge.s32.totalorder %s41, 2
      %s43 = scalar_select %p42, 0, %s41
      %s44 = ssub.s32 %s31, %s43
      %s45 = ssub.s32 %s32, %s39
      %s46 = sor.u32 %s44, %s45
      %p47 = scmp.eq.s32.totalorder %s46, 0
      %s49 = sadd.s32 %s48, 1
      %s50 = scalar_select %p47, %s48, %s49
      %p53 = pneg %p47
      %p54 = scmp.eq.s32.totalorder %s24, 1
      %p55 = por %p53, %p54
      %p56 = scmp.ne.s32.totalorder %s48, %s51
      %p57 = scmp.eq.s32.totalorder %s24, 0
      %p58 = por %p56, %p57
      %p59 = scmp.ne.s32.totalorder %s48, %s51
      %p60 = scmp.eq.s32.totalorder %s29, 1
      %p61 = por %p59, %p60
      %p62 = scmp.ne.s32.totalorder %s51, %s52
      %p63 = scmp.eq.s32.totalorder %s29, 0
      %p64 = por %p62, %p63
      %p65 = scmp.ne.s32.totalorder %s51, %s52
      %p66 = scmp.eq.s32.totalorder %s30, 1
      %p67 = por %p65, %p66
      %p69 = scmp.ne.s32.totalorder %s52, %s68
      %p70 = scmp.eq.s32.totalorder %s30, 0
      %p71 = por %p69, %p70
      %s73 = sadd.s32 %s72, 1
      %p76 = scmp.eq.s32.totalorder %s24, 1
      %p77 = scmp.ne.s32.totalorder %s72, %s74
      %p78 = scmp.eq.s32.totalorder %s24, 0
      %p79 = por %p77, %p78
      %p80 = scmp.ne.s32.totalorder %s72, %s74
      %p81 = scmp.eq.s32.totalorder %s29, 1
      %p82 = por %p80, %p81
      %p83 = scmp.ne.s32.totalorder %s74, %s75
      %p84 = scmp.eq.s32.totalorder %s29, 0
      %p85 = por %p83, %p84
      %p86 = scmp.ne.s32.totalorder %s74, %s75
      %p87 = scmp.eq.s32.totalorder %s30, 1
      %p88 = por %p86, %p87
      %p90 = scmp.ne.s32.totalorder %s75, %s89
      %p91 = scmp.eq.s32.totalorder %s30, 0
      %p92 = por %p90, %p91
      %s94 = sadd.s32 %s93, 1
      %p97 = scmp.eq.s32.totalorder %s24, 1
      %p98 = scmp.ne.s32.totalorder %s93, %s95
      %p99 = scmp.eq.s32.totalorder %s24, 0
      %p100 = por %p98, %p99
      %p101 = scmp.ne.s32.totalorder %s93, %s95
      %p102 = scmp.eq.s32.totalorder %s29, 1
      %p103 = por %p101, %p102
      %p104 = scmp.ne.s32.totalorder %s95, %s96
      %p105 = scmp.eq.s32.totalorder %s29, 0
      %p106 = por %p104, %p105
      %p107 = scmp.ne.s32.totalorder %s95, %s96
      %p108 = scmp.eq.s32.totalorder %s30, 1
      %p109 = por %p107, %p108
      %p111 = scmp.ne.s32.totalorder %s96, %s110
      %p112 = scmp.eq.s32.totalorder %s30, 0
      %p113 = por %p111, %p112
      %s115 = sadd.s32 %s114, 1
      %p118 = scmp.eq.s32.totalorder %s24, 1
      %p119 = scmp.ne.s32.totalorder %s114, %s116
      %p120 = scmp.eq.s32.totalorder %s24, 0
      %p121 = por %p119, %p120
      %p122 = scmp.ne.s32.totalorder %s114, %s116
      %p123 = scmp.eq.s32.totalorder %s29, 1
      %p124 = por %p122, %p123
      %p125 = scmp.ne.s32.totalorder %s116, %s117
      %p126 = scmp.eq.s32.totalorder %s29, 0
      %p127 = por %p125, %p126
      %p128 = scmp.ne.s32.totalorder %s116, %s117
      %p129 = scmp.eq.s32.totalorder %s30, 1
      %p130 = por %p128, %p129
      %p132 = scmp.ne.s32.totalorder %s117, %s131
      %p133 = scmp.eq.s32.totalorder %s30, 0
      %p134 = por %p132, %p133
      %s135 = ssub.s32 %s31, %s43
      %s136 = ssub.s32 %s32, %s39
      %s137 = sor.u32 %s135, %s136
      %p138 = scmp.eq.s32.totalorder %s137, 0
      %s140 = sadd.s32 %s139, 1
      %s141 = scalar_select %p138, %s139, %s140
      %p144 = pneg %p138
      %p145 = scmp.eq.s32.totalorder %s24, 1
      %p146 = por %p144, %p145
      %p147 = scmp.ne.s32.totalorder %s139, %s142
      %p148 = scmp.eq.s32.totalorder %s24, 0
      %p149 = por %p147, %p148
      %p150 = scmp.ne.s32.totalorder %s139, %s142
      %p151 = scmp.eq.s32.totalorder %s29, 1
      %p152 = por %p150, %p151
      %p153 = scmp.ne.s32.totalorder %s142, %s143
      %p154 = scmp.eq.s32.totalorder %s29, 0
      %p155 = por %p153, %p154
      %p156 = scmp.ne.s32.totalorder %s142, %s143
      %p157 = scmp.eq.s32.totalorder %s30, 1
      %p158 = por %p156, %p157
      %p160 = scmp.ne.s32.totalorder %s143, %s159
      %p161 = scmp.eq.s32.totalorder %s30, 0
      %p162 = por %p160, %p161
      %s163 = ssub.s32 %s31, %s43
      %s164 = ssub.s32 %s32, %s39
      %s165 = sor.u32 %s163, %s164
      %p166 = scmp.eq.s32.totalorder %s165, 0
      %s168 = sadd.s32 %s167, 1
      %s169 = scalar_select %p166, %s167, %s168
      %p172 = pneg %p166
      %p173 = scmp.eq.s32.totalorder %s24, 1
      %p174 = por %p172, %p173
      %p175 = scmp.ne.s32.totalorder %s167, %s170
      %p176 = scmp.eq.s32.totalorder %s24, 0
      %p177 = por %p175, %p176
      %p178 = scmp.ne.s32.totalorder %s167, %s170
      %p179 = scmp.eq.s32.totalorder %s29, 1
      %p180 = por %p178, %p179
      %p181 = scmp.ne.s32.totalorder %s170, %s171
      %p182 = scmp.eq.s32.totalorder %s29, 0
      %p183 = por %p181, %p182
      %p184 = scmp.ne.s32.totalorder %s170, %s171
      %p185 = scmp.eq.s32.totalorder %s30, 1
      %p186 = por %p184, %p185
      %p188 = scmp.ne.s32.totalorder %s171, %s187
      %p189 = scmp.eq.s32.totalorder %s30, 0
      %p190 = por %p188, %p189
      %s191 = ssub.s32 %s31, %s43
      %s192 = ssub.s32 %s32, %s39
      %s193 = sor.u32 %s191, %s192
      %p194 = scmp.eq.s32.totalorder %s193, 0
      %s196 = sadd.s32 %s195, 1
      %s197 = scalar_select %p194, %s195, %s196
      %p200 = pneg %p194
      %p201 = scmp.eq.s32.totalorder %s24, 1
      %p202 = por %p200, %p201
      %p203 = scmp.ne.s32.totalorder %s195, %s198
      %p204 = scmp.eq.s32.totalorder %s24, 0
      %p205 = por %p203, %p204
      %p206 = scmp.ne.s32.totalorder %s195, %s198
      %p207 = scmp.eq.s32.totalorder %s29, 1
      %p208 = por %p206, %p207
      %p209 = scmp.ne.s32.totalorder %s198, %s199
      %p210 = scmp.eq.s32.totalorder %s29, 0
      %p211 = por %p209, %p210
      %p212 = scmp.ne.s32.totalorder %s198, %s199
      %p213 = scmp.eq.s32.totalorder %s30, 1
      %p214 = por %p212, %p213
      %p216 = scmp.ne.s32.totalorder %s199, %s215
      %p217 = scmp.eq.s32.totalorder %s30, 0
      %p218 = por %p216, %p217
      %p219 = scmp.le.s32.totalorder 1, %s24
      %p220 = scmp.lt.s32.totalorder %s24, 3
      %p221 = pnand %p219, %p220
      %p222 = pneg %p221
      // Predicated region
      $region9: #{tpu_custom_call.1} parent=5 // pred_check
        _
      $region10: #{tpu_custom_call.1} parent=5 // pred_check_branch
        %224 = sbr.rel (%p221) target = $region12
      $region11: #{tpu_custom_call.1} parent=5 // pred_region
        %s225 = ssub.s32 %s24, 1
        // Predicated region
        $region13: #{tpu_custom_call.1} parent=11 // pred_check
          %p226 = pneg %p85
        $region14: #{tpu_custom_call.1} parent=11 // pred_check_branch
          %228 = sbr.rel (%p226) target = $region16
        $region15: #{tpu_custom_call.1} parent=11 // pred_region
          %230 = vsyncadd [#allocation6], 0
          %s232 = sshll.u32 %s1, 4
          %s233 = int_to_ptr.hbm [resolvable:$true] %s232
          %s234 = sshll.u32 [#allocation5], 4
          %s235 = int_to_ptr.vmem [resolvable:$true] %s234
          %237 = dma.hbm_to_vmem [thread:$0]  %s233, 32, %s235, [#allocation6]
        $region16: #{tpu_custom_call.1} parent=11 // pred_fallthru
          _
        // Predicated region
        $region17: #{tpu_custom_call.1} parent=11 // pred_check
          %p238 = pneg %p106
        $region18: #{tpu_custom_call.1} parent=11 // pred_check_branch
          %240 = sbr.rel (%p238) target = $region20
        $region19: #{tpu_custom_call.1} parent=11 // pred_region
          %242 = vsyncadd [#allocation6], 0
          %s244 = sshll.u32 %s2, 4
          %s245 = int_to_ptr.hbm [resolvable:$true] %s244
          %s246 = sshll.u32 [#allocation7], 4
          %s247 = int_to_ptr.vmem [resolvable:$true] %s246
          %249 = dma.hbm_to_vmem [thread:$0]  %s245, 32, %s247, [#allocation6]
        $region20: #{tpu_custom_call.1} parent=11 // pred_fallthru
          _
        // Predicated region
        $region21: #{tpu_custom_call.1} parent=11 // pred_check
          %p250 = pneg %p127
        $region22: #{tpu_custom_call.1} parent=11 // pred_check_branch
          %252 = sbr.rel (%p250) target = $region24
        $region23: #{tpu_custom_call.1} parent=11 // pred_region
          %254 = vsyncadd [#allocation9], 0
          %s255 = sshll.u32 %s3, 4
          %s256 = int_to_ptr.hbm [resolvable:$true] %s255
          %s257 = sshll.u32 [#allocation8], 4
          %s258 = int_to_ptr.vmem [resolvable:$true] %s257
          %263 = dma.hbm_to_vmem [thread:$0]  %s256, 12288, %s258, [#allocation9], 384, 384, 24
        $region24: #{tpu_custom_call.1} parent=11 // pred_fallthru
          _
      $region12: #{tpu_custom_call.1} parent=5 // pred_fallthru
        _
      %p264 = scmp.lt.s32.totalorder %s24, 2
      // Predicated region
      $region25: #{tpu_custom_call.1} parent=5 // pred_check
        %p265 = pneg %p264
      $region26: #{tpu_custom_call.1} parent=5 // pred_check_branch
        %267 = sbr.rel (%p265) target = $region28
      $region27: #{tpu_custom_call.1} parent=5 // pred_region
        // Predicated region
        $region29: #{tpu_custom_call.1} parent=27 // pred_check
          %p268 = pneg %p58
        $region30: #{tpu_custom_call.1} parent=27 // pred_check_branch
          %270 = sbr.rel (%p268) target = $region32
        $region31: #{tpu_custom_call.1} parent=27 // pred_region
          %s271 = sand.u32 %s48, 1
          %s272 = scalar_lea.sflag [#allocation3], %s271
          %s273 = sand.u32 %s48, 1
          %s274 = smul.addr %s273, 16
          %s275 = scalar_lea.vmem [#allocation2], %s274
          %277 = vsyncadd %s272, 0
          %s278 = smul.addr %s32, 2
          %s279 = smul.addr %s31, 2
          %s280 = sadd.s32 %s278, %s279
          %s281 = smul.addr %s280, 8
          %s282 = scalar_lea.hbm %s0, %s281
          %s284 = sshll.u32 %s282, 4
          %s285 = int_to_ptr.hbm [resolvable:$true] %s284
          %s286 = sshll.u32 %s275, 4
          %s287 = int_to_ptr.vmem [resolvable:$true] %s286
          %289 = dma.hbm_to_vmem [thread:$0]  %s285, 256, %s287, %s272
        $region32: #{tpu_custom_call.1} parent=27 // pred_fallthru
          _
      $region28: #{tpu_custom_call.1} parent=5 // pred_fallthru
        _
      %p290 = scmp.le.s32.totalorder 1, %s24
      %p291 = scmp.lt.s32.totalorder %s24, 3
      %p292 = pnand %p290, %p291
      %p293 = pneg %p292
      // Predicated region
      $region33: #{tpu_custom_call.1} parent=5 // pred_check
        _
      $region34: #{tpu_custom_call.1} parent=5 // pred_check_branch
        %295 = sbr.rel (%p292) target = $region36
      $region35: #{tpu_custom_call.1} parent=5 // pred_region
        %s296 = ssub.s32 %s24, 1
        %s297 = sand.u32 %s51, 1
        %s298 = scalar_lea.sflag [#allocation3], %s297
        %s299 = sand.u32 %s51, 1
        %s300 = smul.addr %s299, 16
        %s301 = scalar_lea.vmem [#allocation2], %s300
        // Predicated region
        $region37: #{tpu_custom_call.1} parent=35 // pred_check
          %p302 = pneg %p64
        $region38: #{tpu_custom_call.1} parent=35 // pred_check_branch
          %304 = sbr.rel (%p302) target = $region40
        $region39: #{tpu_custom_call.1} parent=35 // pred_region
          %306 = dma.done %s298, 256
        $region40: #{tpu_custom_call.1} parent=35 // pred_fallthru
          _
        // Predicated region
        $region41: #{tpu_custom_call.1} parent=35 // pred_check
          %p307 = pneg %p85
        $region42: #{tpu_custom_call.1} parent=35 // pred_check_branch
          %309 = sbr.rel (%p307) target = $region44
        $region43: #{tpu_custom_call.1} parent=35 // pred_region
          %311 = dma.done [#allocation6], 32
        $region44: #{tpu_custom_call.1} parent=35 // pred_fallthru
          _
        // Predicated region
        $region45: #{tpu_custom_call.1} parent=35 // pred_check
          %p312 = pneg %p106
        $region46: #{tpu_custom_call.1} parent=35 // pred_check_branch
          %314 = sbr.rel (%p312) target = $region48
        $region47: #{tpu_custom_call.1} parent=35 // pred_region
          %316 = dma.done [#allocation6], 32
        $region48: #{tpu_custom_call.1} parent=35 // pred_fallthru
          _
        // Predicated region
        $region49: #{tpu_custom_call.1} parent=35 // pred_check
          %p317 = pneg %p127
        $region50: #{tpu_custom_call.1} parent=35 // pred_check_branch
          %319 = sbr.rel (%p317) target = $region52
        $region51: #{tpu_custom_call.1} parent=35 // pred_region
          %321 = dma.done [#allocation9], 12288
        $region52: #{tpu_custom_call.1} parent=35 // pred_fallthru
          _
        %s322 = sand.u32 %s51, 1
        %s323 = scalar_lea.sflag [#allocation3], %s322
        %s324 = sand.u32 %s51, 1
        %s325 = smul.addr %s324, 16
        %s326 = scalar_lea.vmem [#allocation2], %s325
        %p327 = pneg %p64
        %p328 = pneg %p61
        %p329 = pneg %p85
        %p330 = pneg %p82
        %p331 = pneg %p106
        %p332 = pneg %p103
        %p333 = pneg %p127
        %p334 = pneg %p124
        %p335 = pneg %p155
        %p336 = pneg %p152
        %s337 = sand.u32 %s142, 1
        %s338 = scalar_lea.sflag [#allocation4], %s337
        %s339 = sand.u32 %s142, 1
        %s340 = smul.addr %s339, 8
        %s341 = scalar_lea.vmem [#allocation10], %s340
        %p342 = pneg %p183
        %p343 = pneg %p180
        %s344 = sand.u32 %s29, 1
        %s345 = scalar_lea.sflag [#allocation12], %s344
        %s346 = sand.u32 %s170, 1
        %s347 = smul.addr %s346, 8
        %s348 = scalar_lea.vmem [#allocation11], %s347
        %p349 = pneg %p211
        %p350 = pneg %p208
        %s351 = sand.u32 %s29, 1
        %s352 = scalar_lea.sflag [#allocation12], %s351
        %s353 = sand.u32 %s198, 1
        %s354 = smul.addr %s353, 8
        %s355 = scalar_lea.vmem [#allocation13], %s354
        %v356 = vld [vmem:[%s301] sm:$0xff]
        %v357 = vld [vmem:[%s301 + $0x8] sm:$0xff]
        %v358 = vld [vmem:[#allocation5] sm:$0x3]
        %v359 = vld [vmem:[#allocation7] sm:$0x3]
        %v360 = vadd.f32 %v356, %v357
        %361 = vadd.xlane.f32.xlu0 %v360
        %v362 = vpop.xlane.xlu0 %361
        %v363 = vrcp.pop 256.0
        %v364 = vmul.f32 256.0, %v363
        %v365 = vsub.f32 1.0, %v364
        %v366 = vmul.f32 %v363, %v365
        %v367 = vadd.f32 %v363, %v366
        %vm368 = vweird.f32 %v363
        %v369 = vsel %vm368, %v363, %v367
        %v370 = vmul.f32 %v362, %v369
        %v371 = vmul.f32 %v356, %v356
        %v372 = vmul.f32 %v357, %v357
        %v373 = vadd.f32 %v371, %v372
        %374 = vadd.xlane.f32.xlu0 %v373
        %v375 = vpop.xlane.xlu0 %374
        %v376 = vmul.f32 %v375, %v369
        %v377 = vmul.f32 %v370, %v370
        %v378 = vsub.f32 %v376, %v377
        %v379 = vmax.f32 %v378, 0.0
        %v380 = vsub.f32 %v356, %v370
        %v381 = vsub.f32 %v357, %v370
        %v382 = vadd.f32 %v379, 1e-05
        %v383 = vrsqrt.pop %v382
        %v384 = vmul.f32 %v383, %v382
        %v385 = vmul.f32 %v384, %v383
        %v386 = vmul.f32 0.5, %v385
        %v387 = vsub.f32 1.5, %v386
        %v388 = vmul.f32 %v383, %v387
        %vm389 = vweird.f32 %v382
        %vm390 = vweird.f32 %v383
        %vm391 = vmor %vm389, %vm390
        %v392 = vsel %vm391, %v383, %v388
        %v393 = vmul.f32 %v380, %v392
        %v394 = vmul.f32 %v381, %v392
        %v396 = vperm.slane %v358, 0
        %v397 = vperm.slane %v358, 1
        %v400 = vmul.f32 %v393, %v396
        %v401 = vmul.f32 %v394, %v397
        %v403 = vperm.slane %v359, 0
        %v404 = vperm.slane %v359, 1
        %v407 = vadd.f32 %v400, %v403
        %v408 = vadd.f32 %v401, %v404
        %v409 = vpack.c.bf16 %v407, %v407
        %v410 = vpack.c.bf16 %v408, %v408
        %v411 = vld [vmem:[#allocation8] sm:$0xff]
        %v412 = vld [vmem:[#allocation8 + $0x8] sm:$0xff]
        %v413 = vld [vmem:[#allocation8 + $0x10] sm:$0xff]
        %v414 = vld [vmem:[#allocation8 + $0x18] sm:$0xff]
        %v415 = vld [vmem:[#allocation8 + $0x20] sm:$0xff]
        %v416 = vld [vmem:[#allocation8 + $0x28] sm:$0xff]
        %v417 = vld [vmem:[#allocation8 + $0x30] sm:$0xff]
        %v418 = vld [vmem:[#allocation8 + $0x38] sm:$0xff]
        %v419 = vld [vmem:[#allocation8 + $0x40] sm:$0xff]
        %v420 = vld [vmem:[#allocation8 + $0x48] sm:$0xff]
        %v421 = vld [vmem:[#allocation8 + $0x50] sm:$0xff]
        %v422 = vld [vmem:[#allocation8 + $0x58] sm:$0xff]
        %v423 = vld [vmem:[#allocation8 + $0x60] sm:$0xff]
        %v424 = vld [vmem:[#allocation8 + $0x68] sm:$0xff]
        %v425 = vld [vmem:[#allocation8 + $0x70] sm:$0xff]
        %v426 = vld [vmem:[#allocation8 + $0x78] sm:$0xff]
        %v427 = vld [vmem:[#allocation8 + $0x80] sm:$0xff]
        %v428 = vld [vmem:[#allocation8 + $0x88] sm:$0xff]
        %v429 = vld [vmem:[#allocation8 + $0x90] sm:$0xff]
        %v430 = vld [vmem:[#allocation8 + $0x98] sm:$0xff]
        %v431 = vld [vmem:[#allocation8 + $0xa0] sm:$0xff]
        %v432 = vld [vmem:[#allocation8 + $0xa8] sm:$0xff]
        %v433 = vld [vmem:[#allocation8 + $0xb0] sm:$0xff]
        %v434 = vld [vmem:[#allocation8 + $0xb8] sm:$0xff]
        %v435 = vld [vmem:[#allocation8 + $0xc0] sm:$0xff]
        %v436 = vld [vmem:[#allocation8 + $0xc8] sm:$0xff]
        %v437 = vld [vmem:[#allocation8 + $0xd0] sm:$0xff]
        %v438 = vld [vmem:[#allocation8 + $0xd8] sm:$0xff]
        %v439 = vld [vmem:[#allocation8 + $0xe0] sm:$0xff]
        %v440 = vld [vmem:[#allocation8 + $0xe8] sm:$0xff]
        %v441 = vld [vmem:[#allocation8 + $0xf0] sm:$0xff]
        %v442 = vld [vmem:[#allocation8 + $0xf8] sm:$0xff]
        %v443 = vld [vmem:[#allocation8 + $0x100] sm:$0xff]
        %v444 = vld [vmem:[#allocation8 + $0x108] sm:$0xff]
        %v445 = vld [vmem:[#allocation8 + $0x110] sm:$0xff]
        %v446 = vld [vmem:[#allocation8 + $0x118] sm:$0xff]
        %v447 = vld [vmem:[#allocation8 + $0x120] sm:$0xff]
        %v448 = vld [vmem:[#allocation8 + $0x128] sm:$0xff]
        %v449 = vld [vmem:[#allocation8 + $0x130] sm:$0xff]
        %v450 = vld [vmem:[#allocation8 + $0x138] sm:$0xff]
        %v451 = vld [vmem:[#allocation8 + $0x140] sm:$0xff]
        %v452 = vld [vmem:[#allocation8 + $0x148] sm:$0xff]
        %v453 = vld [vmem:[#allocation8 + $0x150] sm:$0xff]
        %v454 = vld [vmem:[#allocation8 + $0x158] sm:$0xff]
        %v455 = vld [vmem:[#allocation8 + $0x160] sm:$0xff]
        %v456 = vld [vmem:[#allocation8 + $0x168] sm:$0xff]
        %v457 = vld [vmem:[#allocation8 + $0x170] sm:$0xff]
        %v458 = vld [vmem:[#allocation8 + $0x178] sm:$0xff]
        %v459 = vld [vmem:[#allocation8 + $0x180] sm:$0xff]
        %v460 = vld [vmem:[#allocation8 + $0x188] sm:$0xff]
        %v461 = vld [vmem:[#allocation8 + $0x190] sm:$0xff]
        %v462 = vld [vmem:[#allocation8 + $0x198] sm:$0xff]
        %v463 = vld [vmem:[#allocation8 + $0x1a0] sm:$0xff]
        %v464 = vld [vmem:[#allocation8 + $0x1a8] sm:$0xff]
        %v465 = vld [vmem:[#allocation8 + $0x1b0] sm:$0xff]
        %v466 = vld [vmem:[#allocation8 + $0x1b8] sm:$0xff]
        %v467 = vld [vmem:[#allocation8 + $0x1c0] sm:$0xff]
        %v468 = vld [vmem:[#allocation8 + $0x1c8] sm:$0xff]
        %v469 = vld [vmem:[#allocation8 + $0x1d0] sm:$0xff]
        %v470 = vld [vmem:[#allocation8 + $0x1d8] sm:$0xff]
        %v471 = vld [vmem:[#allocation8 + $0x1e0] sm:$0xff]
        %v472 = vld [vmem:[#allocation8 + $0x1e8] sm:$0xff]
        %v473 = vld [vmem:[#allocation8 + $0x1f0] sm:$0xff]
        %v474 = vld [vmem:[#allocation8 + $0x1f8] sm:$0xff]
        %v475 = vld [vmem:[#allocation8 + $0x200] sm:$0xff]
        %v476 = vld [vmem:[#allocation8 + $0x208] sm:$0xff]
        %v477 = vld [vmem:[#allocation8 + $0x210] sm:$0xff]
        %v478 = vld [vmem:[#allocation8 + $0x218] sm:$0xff]
        %v479 = vld [vmem:[#allocation8 + $0x220] sm:$0xff]
        %v480 = vld [vmem:[#allocation8 + $0x228] sm:$0xff]
        %v481 = vld [vmem:[#allocation8 + $0x230] sm:$0xff]
        %v482 = vld [vmem:[#allocation8 + $0x238] sm:$0xff]
        %v483 = vld [vmem:[#allocation8 + $0x240] sm:$0xff]
        %v484 = vld [vmem:[#allocation8 + $0x248] sm:$0xff]
        %v485 = vld [vmem:[#allocation8 + $0x250] sm:$0xff]
        %v486 = vld [vmem:[#allocation8 + $0x258] sm:$0xff]
        %v487 = vld [vmem:[#allocation8 + $0x260] sm:$0xff]
        %v488 = vld [vmem:[#allocation8 + $0x268] sm:$0xff]
        %v489 = vld [vmem:[#allocation8 + $0x270] sm:$0xff]
        %v490 = vld [vmem:[#allocation8 + $0x278] sm:$0xff]
        %v491 = vld [vmem:[#allocation8 + $0x280] sm:$0xff]
        %v492 = vld [vmem:[#allocation8 + $0x288] sm:$0xff]
        %v493 = vld [vmem:[#allocation8 + $0x290] sm:$0xff]
        %v494 = vld [vmem:[#allocation8 + $0x298] sm:$0xff]
        %v495 = vld [vmem:[#allocation8 + $0x2a0] sm:$0xff]
        %v496 = vld [vmem:[#allocation8 + $0x2a8] sm:$0xff]
        %v497 = vld [vmem:[#allocation8 + $0x2b0] sm:$0xff]
        %v498 = vld [vmem:[#allocation8 + $0x2b8] sm:$0xff]
        %v499 = vld [vmem:[#allocation8 + $0x2c0] sm:$0xff]
        %v500 = vld [vmem:[#allocation8 + $0x2c8] sm:$0xff]
        %v501 = vld [vmem:[#allocation8 + $0x2d0] sm:$0xff]
        %v502 = vld [vmem:[#allocation8 + $0x2d8] sm:$0xff]
        %v503 = vld [vmem:[#allocation8 + $0x2e0] sm:$0xff]
        %v504 = vld [vmem:[#allocation8 + $0x2e8] sm:$0xff]
        %v505 = vld [vmem:[#allocation8 + $0x2f0] sm:$0xff]
        %v506 = vld [vmem:[#allocation8 + $0x2f8] sm:$0xff]
        %v603 = vunpack.c.l.b16 %v411
        %v604 = vunpack.c.h.b16 %v411
        %v605 = vunpack.c.l.b16 %v412
        %v606 = vunpack.c.h.b16 %v412
        %v607 = vunpack.c.l.b16 %v413
        %v608 = vunpack.c.h.b16 %v413
        %v609 = vunpack.c.l.b16 %v414
        %v610 = vunpack.c.h.b16 %v414
        %v611 = vunpack.c.l.b16 %v415
        %v612 = vunpack.c.h.b16 %v415
        %v613 = vunpack.c.l.b16 %v416
        %v614 = vunpack.c.h.b16 %v416
        %v615 = vunpack.c.l.b16 %v417
        %v616 = vunpack.c.h.b16 %v417
        %v617 = vunpack.c.l.b16 %v418
        %v618 = vunpack.c.h.b16 %v418
        %v619 = vunpack.c.l.b16 %v419
        %v620 = vunpack.c.h.b16 %v419
        %v621 = vunpack.c.l.b16 %v420
        %v622 = vunpack.c.h.b16 %v420
        %v623 = vunpack.c.l.b16 %v421
        %v624 = vunpack.c.h.b16 %v421
        %v625 = vunpack.c.l.b16 %v422
        %v626 = vunpack.c.h.b16 %v422
        %v627 = vunpack.c.l.b16 %v423
        %v628 = vunpack.c.h.b16 %v423
        %v629 = vunpack.c.l.b16 %v424
        %v630 = vunpack.c.h.b16 %v424
        %v631 = vunpack.c.l.b16 %v425
        %v632 = vunpack.c.h.b16 %v425
        %v633 = vunpack.c.l.b16 %v426
        %v634 = vunpack.c.h.b16 %v426
        %v635 = vunpack.c.l.b16 %v427
        %v636 = vunpack.c.h.b16 %v427
        %v637 = vunpack.c.l.b16 %v428
        %v638 = vunpack.c.h.b16 %v428
        %v639 = vunpack.c.l.b16 %v429
        %v640 = vunpack.c.h.b16 %v429
        %v641 = vunpack.c.l.b16 %v430
        %v642 = vunpack.c.h.b16 %v430
        %v643 = vunpack.c.l.b16 %v431
        %v644 = vunpack.c.h.b16 %v431
        %v645 = vunpack.c.l.b16 %v432
        %v646 = vunpack.c.h.b16 %v432
        %v647 = vunpack.c.l.b16 %v433
        %v648 = vunpack.c.h.b16 %v433
        %v649 = vunpack.c.l.b16 %v434
        %v650 = vunpack.c.h.b16 %v434
        %v651 = vunpack.c.l.b16 %v435
        %v652 = vunpack.c.h.b16 %v435
        %v653 = vunpack.c.l.b16 %v436
        %v654 = vunpack.c.h.b16 %v436
        %v655 = vunpack.c.l.b16 %v437
        %v656 = vunpack.c.h.b16 %v437
        %v657 = vunpack.c.l.b16 %v438
        %v658 = vunpack.c.h.b16 %v438
        %v659 = vunpack.c.l.b16 %v439
        %v660 = vunpack.c.h.b16 %v439
        %v661 = vunpack.c.l.b16 %v440
        %v662 = vunpack.c.h.b16 %v440
        %v663 = vunpack.c.l.b16 %v441
        %v664 = vunpack.c.h.b16 %v441
        %v665 = vunpack.c.l.b16 %v442
        %v666 = vunpack.c.h.b16 %v442
        %v667 = vunpack.c.l.b16 %v443
        %v668 = vunpack.c.h.b16 %v443
        %v669 = vunpack.c.l.b16 %v444
        %v670 = vunpack.c.h.b16 %v444
        %v671 = vunpack.c.l.b16 %v445
        %v672 = vunpack.c.h.b16 %v445
        %v673 = vunpack.c.l.b16 %v446
        %v674 = vunpack.c.h.b16 %v446
        %v675 = vunpack.c.l.b16 %v447
        %v676 = vunpack.c.h.b16 %v447
        %v677 = vunpack.c.l.b16 %v448
        %v678 = vunpack.c.h.b16 %v448
        %v679 = vunpack.c.l.b16 %v449
        %v680 = vunpack.c.h.b16 %v449
        %v681 = vunpack.c.l.b16 %v450
        %v682 = vunpack.c.h.b16 %v450
        %v683 = vunpack.c.l.b16 %v451
        %v684 = vunpack.c.h.b16 %v451
        %v685 = vunpack.c.l.b16 %v452
        %v686 = vunpack.c.h.b16 %v452
        %v687 = vunpack.c.l.b16 %v453
        %v688 = vunpack.c.h.b16 %v453
        %v689 = vunpack.c.l.b16 %v454
        %v690 = vunpack.c.h.b16 %v454
        %v691 = vunpack.c.l.b16 %v455
        %v692 = vunpack.c.h.b16 %v455
        %v693 = vunpack.c.l.b16 %v456
        %v694 = vunpack.c.h.b16 %v456
        %v695 = vunpack.c.l.b16 %v457
        %v696 = vunpack.c.h.b16 %v457
        %v697 = vunpack.c.l.b16 %v458
        %v698 = vunpack.c.h.b16 %v458
        %v699 = vunpack.c.l.b16 %v459
        %v700 = vunpack.c.h.b16 %v459
        %v701 = vunpack.c.l.b16 %v460
        %v702 = vunpack.c.h.b16 %v460
        %v703 = vunpack.c.l.b16 %v461
        %v704 = vunpack.c.h.b16 %v461
        %v705 = vunpack.c.l.b16 %v462
        %v706 = vunpack.c.h.b16 %v462
        %v707 = vunpack.c.l.b16 %v463
        %v708 = vunpack.c.h.b16 %v463
        %v709 = vunpack.c.l.b16 %v464
        %v710 = vunpack.c.h.b16 %v464
        %v711 = vunpack.c.l.b16 %v465
        %v712 = vunpack.c.h.b16 %v465
        %v713 = vunpack.c.l.b16 %v466
        %v714 = vunpack.c.h.b16 %v466
        %v715 = vunpack.c.l.b16 %v467
        %v716 = vunpack.c.h.b16 %v467
        %v717 = vunpack.c.l.b16 %v468
        %v718 = vunpack.c.h.b16 %v468
        %v719 = vunpack.c.l.b16 %v469
        %v720 = vunpack.c.h.b16 %v469
        %v721 = vunpack.c.l.b16 %v470
        %v722 = vunpack.c.h.b16 %v470
        %v723 = vunpack.c.l.b16 %v471
        %v724 = vunpack.c.h.b16 %v471
        %v725 = vunpack.c.l.b16 %v472
        %v726 = vunpack.c.h.b16 %v472
        %v727 = vunpack.c.l.b16 %v473
        %v728 = vunpack.c.h.b16 %v473
        %v729 = vunpack.c.l.b16 %v474
        %v730 = vunpack.c.h.b16 %v474
        %v731 = vunpack.c.l.b16 %v475
        %v732 = vunpack.c.h.b16 %v475
        %v733 = vunpack.c.l.b16 %v476
        %v734 = vunpack.c.h.b16 %v476
        %v735 = vunpack.c.l.b16 %v477
        %v736 = vunpack.c.h.b16 %v477
        %v737 = vunpack.c.l.b16 %v478
        %v738 = vunpack.c.h.b16 %v478
        %v739 = vunpack.c.l.b16 %v479
        %v740 = vunpack.c.h.b16 %v479
        %v741 = vunpack.c.l.b16 %v480
        %v742 = vunpack.c.h.b16 %v480
        %v743 = vunpack.c.l.b16 %v481
        %v744 = vunpack.c.h.b16 %v481
        %v745 = vunpack.c.l.b16 %v482
        %v746 = vunpack.c.h.b16 %v482
        %v747 = vunpack.c.l.b16 %v483
        %v748 = vunpack.c.h.b16 %v483
        %v749 = vunpack.c.l.b16 %v484
        %v750 = vunpack.c.h.b16 %v484
        %v751 = vunpack.c.l.b16 %v485
        %v752 = vunpack.c.h.b16 %v485
        %v753 = vunpack.c.l.b16 %v486
        %v754 = vunpack.c.h.b16 %v486
        %v755 = vunpack.c.l.b16 %v487
        %v756 = vunpack.c.h.b16 %v487
        %v757 = vunpack.c.l.b16 %v488
        %v758 = vunpack.c.h.b16 %v488
        %v759 = vunpack.c.l.b16 %v489
        %v760 = vunpack.c.h.b16 %v489
        %v761 = vunpack.c.l.b16 %v490
        %v762 = vunpack.c.h.b16 %v490
        %v763 = vunpack.c.l.b16 %v491
        %v764 = vunpack.c.h.b16 %v491
        %v765 = vunpack.c.l.b16 %v492
        %v766 = vunpack.c.h.b16 %v492
        %v767 = vunpack.c.l.b16 %v493
        %v768 = vunpack.c.h.b16 %v493
        %v769 = vunpack.c.l.b16 %v494
        %v770 = vunpack.c.h.b16 %v494
        %v771 = vunpack.c.l.b16 %v495
        %v772 = vunpack.c.h.b16 %v495
        %v773 = vunpack.c.l.b16 %v496
        %v774 = vunpack.c.h.b16 %v496
        %v775 = vunpack.c.l.b16 %v497
        %v776 = vunpack.c.h.b16 %v497
        %v777 = vunpack.c.l.b16 %v498
        %v778 = vunpack.c.h.b16 %v498
        %v779 = vunpack.c.l.b16 %v499
        %v780 = vunpack.c.h.b16 %v499
        %v781 = vunpack.c.l.b16 %v500
        %v782 = vunpack.c.h.b16 %v500
        %v783 = vunpack.c.l.b16 %v501
        %v784 = vunpack.c.h.b16 %v501
        %v785 = vunpack.c.l.b16 %v502
        %v786 = vunpack.c.h.b16 %v502
        %v787 = vunpack.c.l.b16 %v503
        %v788 = vunpack.c.h.b16 %v503
        %v789 = vunpack.c.l.b16 %v504
        %v790 = vunpack.c.h.b16 %v504
        %v791 = vunpack.c.l.b16 %v505
        %v792 = vunpack.c.h.b16 %v505
        %v793 = vunpack.c.l.b16 %v506
        %v794 = vunpack.c.h.b16 %v506
        %v795 = vpack.c.b16 %v609, %v603
        %v796 = vpack.c.b16 %v610, %v604
        %v797 = vpack.c.b16 %v611, %v605
        %v798 = vpack.c.b16 %v612, %v606
        %v799 = vpack.c.b16 %v613, %v607
        %v800 = vpack.c.b16 %v614, %v608
        %v801 = vpack.c.b16 %v621, %v615
        %v802 = vpack.c.b16 %v622, %v616
        %v803 = vpack.c.b16 %v623, %v617
        %v804 = vpack.c.b16 %v624, %v618
        %v805 = vpack.c.b16 %v625, %v619
        %v806 = vpack.c.b16 %v626, %v620
        %v807 = vpack.c.b16 %v633, %v627
        %v808 = vpack.c.b16 %v634, %v628
        %v809 = vpack.c.b16 %v635, %v629
        %v810 = vpack.c.b16 %v636, %v630
        %v811 = vpack.c.b16 %v637, %v631
        %v812 = vpack.c.b16 %v638, %v632
        %v813 = vpack.c.b16 %v645, %v639
        %v814 = vpack.c.b16 %v646, %v640
        %v815 = vpack.c.b16 %v647, %v641
        %v816 = vpack.c.b16 %v648, %v642
        %v817 = vpack.c.b16 %v649, %v643
        %v818 = vpack.c.b16 %v650, %v644
        %v819 = vpack.c.b16 %v657, %v651
        %v820 = vpack.c.b16 %v658, %v652
        %v821 = vpack.c.b16 %v659, %v653
        %v822 = vpack.c.b16 %v660, %v654
        %v823 = vpack.c.b16 %v661, %v655
        %v824 = vpack.c.b16 %v662, %v656
        %v825 = vpack.c.b16 %v669, %v663
        %v826 = vpack.c.b16 %v670, %v664
        %v827 = vpack.c.b16 %v671, %v665
        %v828 = vpack.c.b16 %v672, %v666
        %v829 = vpack.c.b16 %v673, %v667
        %v830 = vpack.c.b16 %v674, %v668
        %v831 = vpack.c.b16 %v681, %v675
        %v832 = vpack.c.b16 %v682, %v676
        %v833 = vpack.c.b16 %v683, %v677
        %v834 = vpack.c.b16 %v684, %v678
        %v835 = vpack.c.b16 %v685, %v679
        %v836 = vpack.c.b16 %v686, %v680
        %v837 = vpack.c.b16 %v693, %v687
        %v838 = vpack.c.b16 %v694, %v688
        %v839 = vpack.c.b16 %v695, %v689
        %v840 = vpack.c.b16 %v696, %v690
        %v841 = vpack.c.b16 %v697, %v691
        %v842 = vpack.c.b16 %v698, %v692
        %v843 = vpack.c.b16 %v705, %v699
        %v844 = vpack.c.b16 %v706, %v700
        %v845 = vpack.c.b16 %v707, %v701
        %v846 = vpack.c.b16 %v708, %v702
        %v847 = vpack.c.b16 %v709, %v703
        %v848 = vpack.c.b16 %v710, %v704
        %v849 = vpack.c.b16 %v717, %v711
        %v850 = vpack.c.b16 %v718, %v712
        %v851 = vpack.c.b16 %v719, %v713
        %v852 = vpack.c.b16 %v720, %v714
        %v853 = vpack.c.b16 %v721, %v715
        %v854 = vpack.c.b16 %v722, %v716
        %v855 = vpack.c.b16 %v729, %v723
        %v856 = vpack.c.b16 %v730, %v724
        %v857 = vpack.c.b16 %v731, %v725
        %v858 = vpack.c.b16 %v732, %v726
        %v859 = vpack.c.b16 %v733, %v727
        %v860 = vpack.c.b16 %v734, %v728
        %v861 = vpack.c.b16 %v741, %v735
        %v862 = vpack.c.b16 %v742, %v736
        %v863 = vpack.c.b16 %v743, %v737
        %v864 = vpack.c.b16 %v744, %v738
        %v865 = vpack.c.b16 %v745, %v739
        %v866 = vpack.c.b16 %v746, %v740
        %v867 = vpack.c.b16 %v753, %v747
        %v868 = vpack.c.b16 %v754, %v748
        %v869 = vpack.c.b16 %v755, %v749
        %v870 = vpack.c.b16 %v756, %v750
        %v871 = vpack.c.b16 %v757, %v751
        %v872 = vpack.c.b16 %v758, %v752
        %v873 = vpack.c.b16 %v765, %v759
        %v874 = vpack.c.b16 %v766, %v760
        %v875 = vpack.c.b16 %v767, %v761
        %v876 = vpack.c.b16 %v768, %v762
        %v877 = vpack.c.b16 %v769, %v763
        %v878 = vpack.c.b16 %v770, %v764
        %v879 = vpack.c.b16 %v777, %v771
        %v880 = vpack.c.b16 %v778, %v772
        %v881 = vpack.c.b16 %v779, %v773
        %v882 = vpack.c.b16 %v780, %v774
        %v883 = vpack.c.b16 %v781, %v775
        %v884 = vpack.c.b16 %v782, %v776
        %v885 = vpack.c.b16 %v789, %v783
        %v886 = vpack.c.b16 %v790, %v784
        %v887 = vpack.c.b16 %v791, %v785
        %v888 = vpack.c.b16 %v792, %v786
        %v889 = vpack.c.b16 %v793, %v787
        %v890 = vpack.c.b16 %v794, %v788
        %987 = vmatpush.bf16.msra.mxu0 %v837
        %988 = vmatpush.bf16.msra.mxu0 %v831
        %989 = vmatpush.bf16.msra.mxu0 %v825
        %990 = vmatpush.bf16.msra.mxu0 %v819
        %991 = vmatpush.bf16.msra.mxu0 %v813
        %992 = vmatpush.bf16.msra.mxu0 %v807
        %993 = vmatpush.bf16.msra.mxu0 %v801
        %994 = vmatpush.bf16.msra.mxu0 %v795
        %995 = vmatmul.bf16.gmra.mxu0 %v409
        %v996 = vpop.f32.mrf.mxu0
        %v997 = vadd.f32 0.0, %v996
        %v998 = vpop.f32.mrf.mxu0
        %999 = vdwg.mxu0
        %1000 = vmatpush.bf16.msra.mxu0 %v885
        %1001 = vmatpush.bf16.msra.mxu0 %v879
        %1002 = vmatpush.bf16.msra.mxu0 %v873
        %1003 = vmatpush.bf16.msra.mxu0 %v867
        %1004 = vmatpush.bf16.msra.mxu0 %v861
        %1005 = vmatpush.bf16.msra.mxu0 %v855
        %1006 = vmatpush.bf16.msra.mxu0 %v849
        %1007 = vmatpush.bf16.msra.mxu0 %v843
        %1008 = vmatmul.bf16.gmra.mxu0 %v410
        %v1009 = vpop.f32.mrf.mxu0
        %v1010 = vadd.f32 %v997, %v1009
        %v1011 = vpop.f32.mrf.mxu0
        %1012 = vdwg.mxu0
        %1013 = vmatpush.bf16.msra.mxu0 %v838
        %1014 = vmatpush.bf16.msra.mxu0 %v832
        %1015 = vmatpush.bf16.msra.mxu0 %v826
        %1016 = vmatpush.bf16.msra.mxu0 %v820
        %1017 = vmatpush.bf16.msra.mxu0 %v814
        %1018 = vmatpush.bf16.msra.mxu0 %v808
        %1019 = vmatpush.bf16.msra.mxu0 %v802
        %1020 = vmatpush.bf16.msra.mxu0 %v796
        %1021 = vmatmul.bf16.gmra.mxu0 %v409
        %v1022 = vpop.f32.mrf.mxu0
        %v1023 = vadd.f32 0.0, %v1022
        %v1024 = vpop.f32.mrf.mxu0
        %1025 = vdwg.mxu0
        %1026 = vmatpush.bf16.msra.mxu0 %v886
        %1027 = vmatpush.bf16.msra.mxu0 %v880
        %1028 = vmatpush.bf16.msra.mxu0 %v874
        %1029 = vmatpush.bf16.msra.mxu0 %v868
        %1030 = vmatpush.bf16.msra.mxu0 %v862
        %1031 = vmatpush.bf16.msra.mxu0 %v856
        %1032 = vmatpush.bf16.msra.mxu0 %v850
        %1033 = vmatpush.bf16.msra.mxu0 %v844
        %1034 = vmatmul.bf16.gmra.mxu0 %v410
        %v1035 = vpop.f32.mrf.mxu0
        %v1036 = vadd.f32 %v1023, %v1035
        %v1037 = vpop.f32.mrf.mxu0
        %1038 = vdwg.mxu0
        %1039 = vmatpush.bf16.msra.mxu0 %v839
        %1040 = vmatpush.bf16.msra.mxu0 %v833
        %1041 = vmatpush.bf16.msra.mxu0 %v827
        %1042 = vmatpush.bf16.msra.mxu0 %v821
        %1043 = vmatpush.bf16.msra.mxu0 %v815
        %1044 = vmatpush.bf16.msra.mxu0 %v809
        %1045 = vmatpush.bf16.msra.mxu0 %v803
        %1046 = vmatpush.bf16.msra.mxu0 %v797
        %1047 = vmatmul.bf16.gmra.mxu0 %v409
        %v1048 = vpop.f32.mrf.mxu0
        %v1049 = vadd.f32 0.0, %v1048
        %v1050 = vpop.f32.mrf.mxu0
        %1051 = vdwg.mxu0
        %1052 = vmatpush.bf16.msra.mxu0 %v887
        %1053 = vmatpush.bf16.msra.mxu0 %v881
        %1054 = vmatpush.bf16.msra.mxu0 %v875
        %1055 = vmatpush.bf16.msra.mxu0 %v869
        %1056 = vmatpush.bf16.msra.mxu0 %v863
        %1057 = vmatpush.bf16.msra.mxu0 %v857
        %1058 = vmatpush.bf16.msra.mxu0 %v851
        %1059 = vmatpush.bf16.msra.mxu0 %v845
        %1060 = vmatmul.bf16.gmra.mxu0 %v410
        %v1061 = vpop.f32.mrf.mxu0
        %v1062 = vadd.f32 %v1049, %v1061
        %v1063 = vpop.f32.mrf.mxu0
        %1064 = vdwg.mxu0
        %1065 = vmatpush.bf16.msra.mxu0 %v840
        %1066 = vmatpush.bf16.msra.mxu0 %v834
        %1067 = vmatpush.bf16.msra.mxu0 %v828
        %1068 = vmatpush.bf16.msra.mxu0 %v822
        %1069 = vmatpush.bf16.msra.mxu0 %v816
        %1070 = vmatpush.bf16.msra.mxu0 %v810
        %1071 = vmatpush.bf16.msra.mxu0 %v804
        %1072 = vmatpush.bf16.msra.mxu0 %v798
        %1073 = vmatmul.bf16.gmra.mxu0 %v409
        %v1074 = vpop.f32.mrf.mxu0
        %v1075 = vadd.f32 0.0, %v1074
        %v1076 = vpop.f32.mrf.mxu0
        %1077 = vdwg.mxu0
        %1078 = vmatpush.bf16.msra.mxu0 %v888
        %1079 = vmatpush.bf16.msra.mxu0 %v882
        %1080 = vmatpush.bf16.msra.mxu0 %v876
        %1081 = vmatpush.bf16.msra.mxu0 %v870
        %1082 = vmatpush.bf16.msra.mxu0 %v864
        %1083 = vmatpush.bf16.msra.mxu0 %v858
        %1084 = vmatpush.bf16.msra.mxu0 %v852
        %1085 = vmatpush.bf16.msra.mxu0 %v846
        %1086 = vmatmul.bf16.gmra.mxu0 %v410
        %v1087 = vpop.f32.mrf.mxu0
        %v1088 = vadd.f32 %v1075, %v1087
        %v1089 = vpop.f32.mrf.mxu0
        %1090 = vdwg.mxu0
        %1091 = vmatpush.bf16.msra.mxu0 %v841
        %1092 = vmatpush.bf16.msra.mxu0 %v835
        %1093 = vmatpush.bf16.msra.mxu0 %v829
        %1094 = vmatpush.bf16.msra.mxu0 %v823
        %1095 = vmatpush.bf16.msra.mxu0 %v817
        %1096 = vmatpush.bf16.msra.mxu0 %v811
        %1097 = vmatpush.bf16.msra.mxu0 %v805
        %1098 = vmatpush.bf16.msra.mxu0 %v799
        %1099 = vmatmul.bf16.gmra.mxu0 %v409
        %v1100 = vpop.f32.mrf.mxu0
        %v1101 = vadd.f32 0.0, %v1100
        %v1102 = vpop.f32.mrf.mxu0
        %1103 = vdwg.mxu0
        %1104 = vmatpush.bf16.msra.mxu0 %v889
        %1105 = vmatpush.bf16.msra.mxu0 %v883
        %1106 = vmatpush.bf16.msra.mxu0 %v877
        %1107 = vmatpush.bf16.msra.mxu0 %v871
        %1108 = vmatpush.bf16.msra.mxu0 %v865
        %1109 = vmatpush.bf16.msra.mxu0 %v859
        %1110 = vmatpush.bf16.msra.mxu0 %v853
        %1111 = vmatpush.bf16.msra.mxu0 %v847
        %1112 = vmatmul.bf16.gmra.mxu0 %v410
        %v1113 = vpop.f32.mrf.mxu0
        %v1114 = vadd.f32 %v1101, %v1113
        %v1115 = vpop.f32.mrf.mxu0
        %1116 = vdwg.mxu0
        %1117 = vmatpush.bf16.msra.mxu0 %v842
        %1118 = vmatpush.bf16.msra.mxu0 %v836
        %1119 = vmatpush.bf16.msra.mxu0 %v830
        %1120 = vmatpush.bf16.msra.mxu0 %v824
        %1121 = vmatpush.bf16.msra.mxu0 %v818
        %1122 = vmatpush.bf16.msra.mxu0 %v812
        %1123 = vmatpush.bf16.msra.mxu0 %v806
        %1124 = vmatpush.bf16.msra.mxu0 %v800
        %1125 = vmatmul.bf16.gmra.mxu0 %v409
        %v1126 = vpop.f32.mrf.mxu0
        %v1127 = vadd.f32 0.0, %v1126
        %v1128 = vpop.f32.mrf.mxu0
        %1129 = vdwg.mxu0
        %1130 = vmatpush.bf16.msra.mxu0 %v890
        %1131 = vmatpush.bf16.msra.mxu0 %v884
        %1132 = vmatpush.bf16.msra.mxu0 %v878
        %1133 = vmatpush.bf16.msra.mxu0 %v872
        %1134 = vmatpush.bf16.msra.mxu0 %v866
        %1135 = vmatpush.bf16.msra.mxu0 %v860
        %1136 = vmatpush.bf16.msra.mxu0 %v854
        %1137 = vmatpush.bf16.msra.mxu0 %v848
        %1138 = vmatmul.bf16.gmra.mxu0 %v410
        %v1139 = vpop.f32.mrf.mxu0
        %v1140 = vadd.f32 %v1127, %v1139
        %v1141 = vpop.f32.mrf.mxu0
        %1142 = vdwg.mxu0
        %v1143 = vpack.c.bf16 %v1036, %v1010
        %1144 = vst [vmem:[%s341] sm:$0xff] %v1143
        %v1145 = vpack.c.bf16 %v1088, %v1062
        %1146 = vst [vmem:[%s348] sm:$0xff] %v1145
        %v1147 = vpack.c.bf16 %v1140, %v1114
        %1148 = vst [vmem:[%s355] sm:$0xff] %v1147
        %s1149 = sand.u32 %s142, 1
        %s1150 = scalar_lea.sflag [#allocation4], %s1149
        %s1151 = sand.u32 %s142, 1
        %s1152 = smul.addr %s1151, 8
        %s1153 = scalar_lea.vmem [#allocation10], %s1152
        %s1154 = sand.u32 %s29, 1
        %s1155 = scalar_lea.sflag [#allocation12], %s1154
        %s1156 = sand.u32 %s170, 1
        %s1157 = smul.addr %s1156, 8
        %s1158 = scalar_lea.vmem [#allocation11], %s1157
        %s1159 = sand.u32 %s29, 1
        %s1160 = scalar_lea.sflag [#allocation12], %s1159
        %s1161 = sand.u32 %s198, 1
        %s1162 = smul.addr %s1161, 8
        %s1163 = scalar_lea.vmem [#allocation13], %s1162
        // Predicated region
        $region53: #{tpu_custom_call.1} parent=35 // pred_check
          %p1164 = pneg %p152
        $region54: #{tpu_custom_call.1} parent=35 // pred_check_branch
          %1166 = sbr.rel (%p1164) target = $region56
        $region55: #{tpu_custom_call.1} parent=35 // pred_region
          %1168 = vsyncadd %s1150, 0
          %s1169 = smul.addr %s34, 2
          %s1170 = smul.addr %s33, 2
          %s1171 = sadd.s32 %s1169, %s1170
          %s1172 = smul.addr %s1171, 4
          %s1173 = scalar_lea.hbm %s4, %s1172
          %s1175 = sshll.u32 %s1153, 4
          %s1176 = int_to_ptr.vmem [resolvable:$true] %s1175
          %s1177 = sshll.u32 %s1173, 4
          %s1178 = int_to_ptr.hbm [resolvable:$true] %s1177
          %1180 = dma.vmem_to_hbm [thread:$0]  %s1176, 128, %s1178, %s1150
        $region56: #{tpu_custom_call.1} parent=35 // pred_fallthru
          _
        // Predicated region
        $region57: #{tpu_custom_call.1} parent=35 // pred_check
          %p1181 = pneg %p180
        $region58: #{tpu_custom_call.1} parent=35 // pred_check_branch
          %1183 = sbr.rel (%p1181) target = $region60
        $region59: #{tpu_custom_call.1} parent=35 // pred_region
          %1185 = vsyncadd %s1155, 0
          %s1186 = smul.addr %s34, 2
          %s1187 = smul.addr %s33, 2
          %s1188 = sadd.s32 %s1186, %s1187
          %s1189 = smul.addr %s1188, 4
          %s1190 = scalar_lea.hbm %s5, %s1189
          %s1192 = sshll.u32 %s1158, 4
          %s1193 = int_to_ptr.vmem [resolvable:$true] %s1192
          %s1194 = sshll.u32 %s1190, 4
          %s1195 = int_to_ptr.hbm [resolvable:$true] %s1194
          %1197 = dma.vmem_to_hbm [thread:$0]  %s1193, 128, %s1195, %s1155
        $region60: #{tpu_custom_call.1} parent=35 // pred_fallthru
          _
        // Predicated region
        $region61: #{tpu_custom_call.1} parent=35 // pred_check
          %p1198 = pneg %p208
        $region62: #{tpu_custom_call.1} parent=35 // pred_check_branch
          %1200 = sbr.rel (%p1198) target = $region64
        $region63: #{tpu_custom_call.1} parent=35 // pred_region
          %1202 = vsyncadd %s1160, 0
          %s1203 = smul.addr %s34, 2
          %s1204 = smul.addr %s33, 2
          %s1205 = sadd.s32 %s1203, %s1204
          %s1206 = smul.addr %s1205, 4
          %s1207 = scalar_lea.hbm %s6, %s1206
          %s1209 = sshll.u32 %s1163, 4
          %s1210 = int_to_ptr.vmem [resolvable:$true] %s1209
          %s1211 = sshll.u32 %s1207, 4
          %s1212 = int_to_ptr.hbm [resolvable:$true] %s1211
          %1214 = dma.vmem_to_hbm [thread:$0]  %s1210, 128, %s1212, %s1160
        $region64: #{tpu_custom_call.1} parent=35 // pred_fallthru
          _
      $region36: #{tpu_custom_call.1} parent=5 // pred_fallthru
        _
      %p1215 = scmp.le.s32.totalorder 2, %s24
      // Predicated region
      $region65: #{tpu_custom_call.1} parent=5 // pred_check
        %p1216 = pneg %p1215
      $region66: #{tpu_custom_call.1} parent=5 // pred_check_branch
        %1218 = sbr.rel (%p1216) target = $region68
      $region67: #{tpu_custom_call.1} parent=5 // pred_region
        %s1219 = ssub.s32 %s24, 2
        // Predicated region
        $region69: #{tpu_custom_call.1} parent=67 // pred_check
          %p1220 = pneg %p158
        $region70: #{tpu_custom_call.1} parent=67 // pred_check_branch
          %1222 = sbr.rel (%p1220) target = $region72
        $region71: #{tpu_custom_call.1} parent=67 // pred_region
          %s1223 = sand.u32 %s143, 1
          %s1224 = scalar_lea.sflag [#allocation4], %s1223
          %s1225 = sand.u32 %s143, 1
          %s1226 = smul.addr %s1225, 8
          %s1227 = scalar_lea.vmem [#allocation10], %s1226
          %1229 = dma.done %s1224, 128
        $region72: #{tpu_custom_call.1} parent=67 // pred_fallthru
          _
        // Predicated region
        $region73: #{tpu_custom_call.1} parent=67 // pred_check
          %p1230 = pneg %p186
        $region74: #{tpu_custom_call.1} parent=67 // pred_check_branch
          %1232 = sbr.rel (%p1230) target = $region76
        $region75: #{tpu_custom_call.1} parent=67 // pred_region
          %s1233 = sand.u32 %s30, 1
          %s1234 = scalar_lea.sflag [#allocation12], %s1233
          %s1235 = sand.u32 %s171, 1
          %s1236 = smul.addr %s1235, 8
          %s1237 = scalar_lea.vmem [#allocation11], %s1236
          %1239 = dma.done %s1234, 128
        $region76: #{tpu_custom_call.1} parent=67 // pred_fallthru
          _
        // Predicated region
        $region77: #{tpu_custom_call.1} parent=67 // pred_check
          %p1240 = pneg %p214
        $region78: #{tpu_custom_call.1} parent=67 // pred_check_branch
          %1242 = sbr.rel (%p1240) target = $region80
        $region79: #{tpu_custom_call.1} parent=67 // pred_region
          %s1243 = sand.u32 %s30, 1
          %s1244 = scalar_lea.sflag [#allocation12], %s1243
          %s1245 = sand.u32 %s199, 1
          %s1246 = smul.addr %s1245, 8
          %s1247 = scalar_lea.vmem [#allocation13], %s1246
          %1249 = dma.done %s1244, 128
        $region80: #{tpu_custom_call.1} parent=67 // pred_fallthru
          _
      $region68: #{tpu_custom_call.1} parent=5 // pred_fallthru
        _
    $region6: #{tpu_custom_call.1} parent=1 // loop_footer
      %s28 = sadd.s32 1, %s24
    $region7: #{tpu_custom_call.1} parent=1 // loop_footer_branch
      %23 = sbr.rel target = $region3
    $region8: #{tpu_custom_call.1} parent=1 // loop_exit
      _
    %1250 = vsyncpa [#allocation3], 1
    %s1251 = scalar_lea.sflag [#allocation3], 1
    %1252 = vsyncpa %s1251, 1
    %1253 = vsyncpa [#allocation6], 1
    %1254 = vsyncpa [#allocation9], 1
    %1255 = vsyncpa [#allocation4], 1
    %s1256 = scalar_lea.sflag [#allocation4], 1
    %1257 = vsyncpa %s1256, 1
    %1258 = vsyncpa [#allocation12], 1
    %s1259 = scalar_lea.sflag [#allocation12], 1
    %1260 = vsyncpa %s1259, 1

</llo_original>
